<compile_context>
chip_gen: v7x
topology: tpu7x:2x2x1
jax: 0.10.0
libtpu: 0.0.40
codegen_flags: <defaults>
</compile_context>

<pallas_src>
import math

import jax
import jax.numpy as jnp
from jax.experimental import pallas as pl
from jax.experimental.pallas import tpu as pltpu

# ----------------------------- model dims (small) -----------------------------
B = 2        # batch
S = 8        # sequence length
D = 32       # model size
H = 4        # attention heads
DK = D // H  # head size
DFF = 64     # feed-forward hidden
LN_EPS = 1e-5
NEG_INF = -1e9


def _layernorm(x, gamma, beta):
    # x: (S, D); gamma/beta: (1, D). Biased variance, matching nn.LayerNorm.
    mean = jnp.mean(x, axis=-1, keepdims=True)
    var = jnp.mean((x - mean) ** 2, axis=-1, keepdims=True)
    return (x - mean) * jax.lax.rsqrt(var + LN_EPS) * gamma + beta


# -------------------------- fused encoder-layer kernel -------------------------
def encoder_layer_kernel(x_ref, mask_ref, pvec_ref,
                         w3_ref, b3_ref, wo3_ref, w1_ref, w2_ref,
                         o_ref):
    x = x_ref[0]                                     # (S, D) f32, one batch row

    # packed per-channel vectors (static slices of one (8,128) block)
    g0 = pvec_ref[0:1, 0:D]
    be0 = pvec_ref[1:2, 0:D]
    g1 = pvec_ref[2:3, 0:D]
    be1 = pvec_ref[3:4, 0:D]
    bo = pvec_ref[4:5, 0:D]
    b2 = pvec_ref[5:6, 0:D]
    b1 = pvec_ref[6:7, 0:DFF]

    # additive key-padding bias (broadcast over heads & queries in the score add).
    # Equivalent to masked_fill(mask==0, -1e9) for any row with >=1 valid key:
    # exp(score - 1e9 - rowmax) underflows to exactly 0 in f32.
    bias = jnp.where(mask_ref[0] == 0.0, NEG_INF, 0.0).astype(jnp.float32)  # (1, S)

    # ---------------- sublayer 0: multi-head self-attention ----------------
    xn = _layernorm(x, g0, be0)                                        # (S, D) f32
    xb = jnp.broadcast_to(xn.astype(jnp.bfloat16), (3 * H, S, D))
    qkv = jnp.einsum("zsd,zdk->zsk", xb, w3_ref[...],
                     preferred_element_type=jnp.float32) + b3_ref[...]  # (3H, S, DK)
    q = qkv[0:H].astype(jnp.bfloat16)        # (H, S, DK); 1/sqrt(DK) folded into Wq
    k = qkv[H:2 * H].astype(jnp.bfloat16)
    v = qkv[2 * H:3 * H].astype(jnp.bfloat16)

    s = jnp.einsum("hqd,hkd->hqk", q, k,
                   preferred_element_type=jnp.float32) + bias           # (H, S, S)
    s = s - jnp.max(s, axis=-1, keepdims=True)
    p = jnp.exp(s)
    p = p * pl.reciprocal(jnp.sum(p, axis=-1, keepdims=True), approx=True)

    ctx = jnp.einsum("hqk,hkd->hqd", p.astype(jnp.bfloat16), v,
                     preferred_element_type=jnp.float32)                # (H, S, DK)
    # concat(heads) @ Wo  ==  sum_h head_h @ Wo[h*DK:(h+1)*DK, :]  (one batched dot)
    outh = jnp.einsum("hqd,hde->hqe", ctx.astype(jnp.bfloat16), wo3_ref[...],
                      preferred_element_type=jnp.float32)               # (H, S, D)
    attn = jnp.sum(outh, axis=0) + bo
    x1 = x + attn                                    # residual (dropout = identity)

    # ---------------- sublayer 1: position-wise feed-forward ----------------
    xn1 = _layernorm(x1, g1, be1)
    hdn = jnp.dot(xn1.astype(jnp.bfloat16), w1_ref[...],
                  preferred_element_type=jnp.float32) + b1
    hdn = jnp.maximum(hdn, 0.0)
    ffn = jnp.dot(hdn.astype(jnp.bfloat16), w2_ref[...],
                  preferred_element_type=jnp.float32) + b2

    o_ref[0] = x1 + ffn                              # residual (dropout = identity)


# --------------------- one-time parameter packing (outside jit) -----------------
def pack_params(p):
    scale = 1.0 / math.sqrt(DK)

    def heads(w):                                   # (D, D) -> (H, D, DK), head-major
        return w.reshape(D, H, DK).transpose(1, 0, 2)

    w3 = jnp.concatenate([heads(p["wq"]) * scale, heads(p["wk"]), heads(p["wv"])],
                         axis=0).astype(jnp.bfloat16)                   # (3H, D, DK)
    b3 = jnp.concatenate([(p["bq"] * scale).reshape(H, 1, DK),
                          p["bk"].reshape(H, 1, DK),
                          p["bv"].reshape(H, 1, DK)],
                         axis=0).astype(jnp.float32)                    # (3H, 1, DK)
    wo3 = p["wo"].reshape(H, DK, D).astype(jnp.bfloat16)                # (H, DK, D)

    pvec = jnp.zeros((8, 128), jnp.float32)
    pvec = pvec.at[0, :D].set(p["ln0_g"][0]).at[1, :D].set(p["ln0_b"][0])
    pvec = pvec.at[2, :D].set(p["ln1_g"][0]).at[3, :D].set(p["ln1_b"][0])
    pvec = pvec.at[4, :D].set(p["bo"][0]).at[5, :D].set(p["b2"][0])
    pvec = pvec.at[6, :DFF].set(p["b1"][0])

    return {"pvec": pvec, "w3": w3, "b3": b3, "wo3": wo3,
            "w1": p["w1"].astype(jnp.bfloat16), "w2": p["w2"].astype(jnp.bfloat16)}


# ------------------------------- python wrapper --------------------------------
@jax.jit
def encoder_layer(x, mask, packed):
    """x: (B, S, D) f32; mask: (B, 1, S) f32 (0 = padded key). Returns (B, S, D)."""
    def full(shape):
        return pl.BlockSpec(shape, lambda b: (0,) * len(shape))

    return pl.pallas_call(
        encoder_layer_kernel,
        out_shape=jax.ShapeDtypeStruct((B, S, D), jnp.float32),
        grid=(B,),
        in_specs=[
            pl.BlockSpec((1, S, D), lambda b: (b, 0, 0)),   # x: one batch per step
            pl.BlockSpec((1, 1, S), lambda b: (b, 0, 0)),   # key-valid mask
            full((8, 128)),                                 # packed LN/bias vectors
            full((3 * H, D, DK)),                           # QKV weights (bf16)
            full((3 * H, 1, DK)),                           # QKV biases (f32)
            full((H, DK, D)),                               # Wo (bf16)
            full((D, DFF)),                                 # W1 (bf16)
            full((DFF, D)),                                 # W2 (bf16)
        ],
        out_specs=pl.BlockSpec((1, S, D), lambda b: (b, 0, 0)),
        compiler_params=pltpu.CompilerParams(
            dimension_semantics=("parallel",)),             # 2-TC sharding on v7x
    )(x, mask, packed["pvec"], packed["w3"], packed["b3"], packed["wo3"],
      packed["w1"], packed["w2"])


# ------------------------------ pure-JAX reference -----------------------------
def encoder_layer_ref(x, mask, p):
    def ln(v, g, b):
        m = jnp.mean(v, axis=-1, keepdims=True)
        var = jnp.mean((v - m) ** 2, axis=-1, keepdims=True)
        return (v - m) / jnp.sqrt(var + LN_EPS) * g + b

    xn = ln(x, p["ln0_g"], p["ln0_b"])
    q = (xn @ p["wq"] + p["bq"]).reshape(B, S, H, DK).transpose(0, 2, 1, 3)
    k = (xn @ p["wk"] + p["bk"]).reshape(B, S, H, DK).transpose(0, 2, 1, 3)
    v = (xn @ p["wv"] + p["bv"]).reshape(B, S, H, DK).transpose(0, 2, 1, 3)
    scores = jnp.einsum("bhqd,bhkd->bhqk", q, k) / math.sqrt(DK)
    scores = jnp.where(mask[:, None, :, :] == 0, NEG_INF, scores)
    attn = jax.nn.softmax(scores, axis=-1)
    o = jnp.einsum("bhqk,bhkd->bhqd", attn, v).transpose(0, 2, 1, 3).reshape(B, S, D)
    x1 = x + (o @ p["wo"] + p["bo"])

    xn1 = ln(x1, p["ln1_g"], p["ln1_b"])
    h = jnp.maximum(xn1 @ p["w1"] + p["b1"], 0.0)
    return x1 + (h @ p["w2"] + p["b2"])


# ------------------------------------ main --------------------------------------
if __name__ == "__main__":
    key = jax.random.PRNGKey(0)
    ks = jax.random.split(key, 14)

    def init(k, shape, scale=0.1):
        return (scale * jax.random.normal(k, shape)).astype(jnp.float32)

    params = {
        "ln0_g": jnp.ones((1, D), jnp.float32),
        "ln0_b": jnp.zeros((1, D), jnp.float32),
        "ln1_g": jnp.ones((1, D), jnp.float32),
        "ln1_b": jnp.zeros((1, D), jnp.float32),
        "wq": init(ks[0], (D, D)), "bq": init(ks[1], (1, D)),
        "wk": init(ks[2], (D, D)), "bk": init(ks[3], (1, D)),
        "wv": init(ks[4], (D, D)), "bv": init(ks[5], (1, D)),
        "wo": init(ks[6], (D, D)), "bo": init(ks[7], (1, D)),
        "w1": init(ks[8], (D, DFF)), "b1": init(ks[9], (1, DFF)),
        "w2": init(ks[10], (DFF, D)), "b2": init(ks[11], (1, D)),
    }
    packed = pack_params(params)      # one-time, outside the jitted call

    x = jax.random.normal(ks[12], (B, S, D), dtype=jnp.float32)

    # key-padding mask (B, 1, S): batch 0 sees all S keys, batch 1 only the first 6
    valid = jnp.array([S, 6])
    key_ok = (jnp.arange(S)[None, :] < valid[:, None]).astype(jnp.float32)   # (B, S)
    mask = key_ok[:, None, :]                                                # (B, 1, S)

    out = encoder_layer(x, mask, packed)
    out = jax.block_until_ready(out)

    ref = encoder_layer_ref(x, mask, params)
    max_err = jnp.max(jnp.abs(out - ref))
    # tolerance 2e-2: bf16 MXU operands + EUP approximate reciprocal vs f32 reference
    assert jnp.allclose(out, ref, rtol=2e-2, atol=2e-2), \
        f"mismatch vs reference (max|err|={max_err})"

    print("KERNEL_OK")
</pallas_src>

<mosaic_0001>
module attributes {stable_mosaic.version = 11 : i64} {
  func.func @encoder_layer_kernel(%arg0: i32, %arg1: memref<1x8x32xf32, #tpu.memory_space<vmem>>, %arg2: memref<1x1x8xf32, #tpu.memory_space<vmem>>, %arg3: memref<8x128xf32, #tpu.memory_space<vmem>>, %arg4: memref<12x32x8xbf16, #tpu.memory_space<vmem>>, %arg5: memref<12x1x8xf32, #tpu.memory_space<vmem>>, %arg6: memref<4x8x32xbf16, #tpu.memory_space<vmem>>, %arg7: memref<32x64xbf16, #tpu.memory_space<vmem>>, %arg8: memref<64x32xbf16, #tpu.memory_space<vmem>>, %arg9: memref<1x8x32xf32, #tpu.memory_space<vmem>>) attributes {dimension_semantics = [#tpu.dimension_semantics<parallel>], iteration_bounds = array<i64: 2>, scalar_prefetch = 0 : i64, scratch_operands = 0 : i64, tpu.core_type = #tpu.core_type<tc>, window_params = [{transform_indices = @transform_0, window_bounds = array<i64: 1, 8, 32>}, {transform_indices = @transform_1, window_bounds = array<i64: 1, 1, 8>}, {pipeline_mode = #tpu.pipeline_mode<synchronous>, transform_indices = @transform_2, window_bounds = array<i64: 8, 128>}, {pipeline_mode = #tpu.pipeline_mode<synchronous>, transform_indices = @transform_3, window_bounds = array<i64: 12, 32, 8>}, {pipeline_mode = #tpu.pipeline_mode<synchronous>, transform_indices = @transform_4, window_bounds = array<i64: 12, 1, 8>}, {pipeline_mode = #tpu.pipeline_mode<synchronous>, transform_indices = @transform_5, window_bounds = array<i64: 4, 8, 32>}, {pipeline_mode = #tpu.pipeline_mode<synchronous>, transform_indices = @transform_6, window_bounds = array<i64: 32, 64>}, {pipeline_mode = #tpu.pipeline_mode<synchronous>, transform_indices = @transform_7, window_bounds = array<i64: 64, 32>}, {transform_indices = @transform_8, window_bounds = array<i64: 1, 8, 32>}]} {
    %c0 = arith.constant 0 : index
    %c0_0 = arith.constant 0 : index
    %c0_1 = arith.constant 0 : index
    %0 = vector.load %arg1[%c0, %c0_0, %c0_1] : memref<1x8x32xf32, #tpu.memory_space<vmem>>, vector<1x8x32xf32>
    %1 = vector.shape_cast %0 : vector<1x8x32xf32> to vector<8x32xf32>
    %c0_2 = arith.constant 0 : index
    %c0_3 = arith.constant 0 : index
    %2 = vector.load %arg3[%c0_2, %c0_3] : memref<8x128xf32, #tpu.memory_space<vmem>>, vector<1x32xf32>
    %c1 = arith.constant 1 : index
    %c0_4 = arith.constant 0 : index
    %3 = vector.load %arg3[%c1, %c0_4] : memref<8x128xf32, #tpu.memory_space<vmem>>, vector<1x32xf32>
    %c2 = arith.constant 2 : index
    %c0_5 = arith.constant 0 : index
    %4 = vector.load %arg3[%c2, %c0_5] : memref<8x128xf32, #tpu.memory_space<vmem>>, vector<1x32xf32>
    %c3 = arith.constant 3 : index
    %c0_6 = arith.constant 0 : index
    %5 = vector.load %arg3[%c3, %c0_6] : memref<8x128xf32, #tpu.memory_space<vmem>>, vector<1x32xf32>
    %c4 = arith.constant 4 : index
    %c0_7 = arith.constant 0 : index
    %6 = vector.load %arg3[%c4, %c0_7] : memref<8x128xf32, #tpu.memory_space<vmem>>, vector<1x32xf32>
    %c5 = arith.constant 5 : index
    %c0_8 = arith.constant 0 : index
    %7 = vector.load %arg3[%c5, %c0_8] : memref<8x128xf32, #tpu.memory_space<vmem>>, vector<1x32xf32>
    %c6 = arith.constant 6 : index
    %c0_9 = arith.constant 0 : index
    %8 = vector.load %arg3[%c6, %c0_9] : memref<8x128xf32, #tpu.memory_space<vmem>>, vector<1x64xf32>
    %c0_10 = arith.constant 0 : index
    %c0_11 = arith.constant 0 : index
    %c0_12 = arith.constant 0 : index
    %9 = vector.load %arg2[%c0_10, %c0_11, %c0_12] : memref<1x1x8xf32, #tpu.memory_space<vmem>>, vector<1x1x8xf32>
    %10 = vector.shape_cast %9 : vector<1x1x8xf32> to vector<1x8xf32>
    %cst = arith.constant 0.000000e+00 : f32
    %11 = vector.broadcast %cst : f32 to vector<1x8xf32>
    %12 = arith.cmpf oeq, %10, %11 : vector<1x8xf32>
    %cst_13 = arith.constant -1.000000e+09 : f32
    %cst_14 = arith.constant 0.000000e+00 : f32
    %13 = vector.broadcast %cst_13 : f32 to vector<1x8xf32>
    %14 = vector.broadcast %cst_14 : f32 to vector<1x8xf32>
    %15 = arith.select %12, %13, %14 : vector<1x8xi1>, vector<1x8xf32>
    %cst_15 = arith.constant dense<0.000000e+00> : vector<8xf32>
    %16 = vector.multi_reduction <add>, %1, %cst_15 [1] : vector<8x32xf32> to vector<8xf32>
    %17 = vector.shape_cast %16 : vector<8xf32> to vector<8x1xf32>
    %cst_16 = arith.constant 3.200000e+01 : f32
    %18 = vector.broadcast %cst_16 : f32 to vector<8x1xf32>
    %19 = arith.divf %17, %18 : vector<8x1xf32>
    %20 = vector.broadcast %19 : vector<8x1xf32> to vector<8x32xf32>
    %21 = arith.subf %1, %20 : vector<8x32xf32>
    %22 = arith.mulf %21, %21 : vector<8x32xf32>
    %cst_17 = arith.constant dense<0.000000e+00> : vector<8xf32>
    %23 = vector.multi_reduction <add>, %22, %cst_17 [1] : vector<8x32xf32> to vector<8xf32>
    %24 = vector.shape_cast %23 : vector<8xf32> to vector<8x1xf32>
    %cst_18 = arith.constant 3.200000e+01 : f32
    %25 = vector.broadcast %cst_18 : f32 to vector<8x1xf32>
    %26 = arith.divf %24, %25 : vector<8x1xf32>
    %27 = vector.broadcast %19 : vector<8x1xf32> to vector<8x32xf32>
    %28 = arith.subf %1, %27 : vector<8x32xf32>
    %cst_19 = arith.constant 9.99999974E-6 : f32
    %29 = vector.broadcast %cst_19 : f32 to vector<8x1xf32>
    %30 = arith.addf %26, %29 : vector<8x1xf32>
    %31 = math.rsqrt %30 : vector<8x1xf32>
    %32 = vector.broadcast %31 : vector<8x1xf32> to vector<8x32xf32>
    %33 = arith.mulf %28, %32 : vector<8x32xf32>
    %34 = vector.broadcast %2 : vector<1x32xf32> to vector<8x32xf32>
    %35 = arith.mulf %33, %34 : vector<8x32xf32>
    %36 = vector.broadcast %3 : vector<1x32xf32> to vector<8x32xf32>
    %37 = arith.addf %35, %36 : vector<8x32xf32>
    %38 = arith.truncf %37 : vector<8x32xf32> to vector<8x32xbf16>
    %39 = vector.shape_cast %38 : vector<8x32xbf16> to vector<1x8x32xbf16>
    %40 = vector.broadcast %39 : vector<1x8x32xbf16> to vector<12x8x32xbf16>
    %c0_20 = arith.constant 0 : index
    %c0_21 = arith.constant 0 : index
    %c0_22 = arith.constant 0 : index
    %41 = vector.load %arg4[%c0_20, %c0_21, %c0_22] : memref<12x32x8xbf16, #tpu.memory_space<vmem>>, vector<12x32x8xbf16>
    "tpu.trace_start"() <{level = 10 : i32, message = "zsd,zdk->zsk"}> : () -> ()
    %cst_23 = arith.constant dense<0.000000e+00> : vector<12x8x8xf32>
    %42 = tpu.matmul %40, %41, %cst_23 {dimension_numbers = #tpu.dot_dimension_numbers<[2], [1], [1], [2], [0, 0, 0, 1, 1, 2], [0], [0]>} : vector<12x8x32xbf16>, vector<12x32x8xbf16>, vector<12x8x8xf32> -> vector<12x8x8xf32>
    "tpu.trace_stop"() : () -> ()
    %c0_24 = arith.constant 0 : index
    %c0_25 = arith.constant 0 : index
    %c0_26 = arith.constant 0 : index
    %43 = vector.load %arg5[%c0_24, %c0_25, %c0_26] : memref<12x1x8xf32, #tpu.memory_space<vmem>>, vector<12x1x8xf32>
    %44 = vector.broadcast %43 : vector<12x1x8xf32> to vector<12x8x8xf32>
    %45 = arith.addf %42, %44 : vector<12x8x8xf32>
    %46 = vector.extract_strided_slice %45 {offsets = [0, 0, 0], sizes = [4, 8, 8], strides = [1, 1, 1]} : vector<12x8x8xf32> to vector<4x8x8xf32>
    %47 = arith.truncf %46 : vector<4x8x8xf32> to vector<4x8x8xbf16>
    %48 = vector.extract_strided_slice %45 {offsets = [4, 0, 0], sizes = [4, 8, 8], strides = [1, 1, 1]} : vector<12x8x8xf32> to vector<4x8x8xf32>
    %49 = arith.truncf %48 : vector<4x8x8xf32> to vector<4x8x8xbf16>
    %50 = vector.extract_strided_slice %45 {offsets = [8, 0, 0], sizes = [4, 8, 8], strides = [1, 1, 1]} : vector<12x8x8xf32> to vector<4x8x8xf32>
    %51 = arith.truncf %50 : vector<4x8x8xf32> to vector<4x8x8xbf16>
    "tpu.trace_start"() <{level = 10 : i32, message = "hqd,hkd->hqk"}> : () -> ()
    %cst_27 = arith.constant dense<0.000000e+00> : vector<4x8x8xf32>
    %52 = tpu.matmul %47, %49, %cst_27 {dimension_numbers = #tpu.dot_dimension_numbers<[2], [2], [1], [1], [0, 0, 0, 1, 1, 1], [0], [0]>} : vector<4x8x8xbf16>, vector<4x8x8xbf16>, vector<4x8x8xf32> -> vector<4x8x8xf32>
    "tpu.trace_stop"() : () -> ()
    %53 = vector.shape_cast %15 : vector<1x8xf32> to vector<1x1x8xf32>
    %54 = vector.broadcast %53 : vector<1x1x8xf32> to vector<4x8x8xf32>
    %55 = arith.addf %52, %54 : vector<4x8x8xf32>
    %cst_28 = arith.constant dense<0xFF800000> : vector<4x8xf32>
    %56 = vector.multi_reduction <maximumf>, %55, %cst_28 [2] : vector<4x8x8xf32> to vector<4x8xf32>
    %57 = vector.shape_cast %56 : vector<4x8xf32> to vector<4x8x1xf32>
    %58 = vector.broadcast %57 : vector<4x8x1xf32> to vector<4x8x8xf32>
    %59 = arith.subf %55, %58 : vector<4x8x8xf32>
    %60 = math.exp %59 : vector<4x8x8xf32>
    %cst_29 = arith.constant dense<0.000000e+00> : vector<4x8xf32>
    %61 = vector.multi_reduction <add>, %60, %cst_29 [2] : vector<4x8x8xf32> to vector<4x8xf32>
    %62 = vector.shape_cast %61 : vector<4x8xf32> to vector<4x8x1xf32>
    %63 = tpu.reciprocal %62 {approx = true} : vector<4x8x1xf32> -> vector<4x8x1xf32>
    %64 = vector.broadcast %63 : vector<4x8x1xf32> to vector<4x8x8xf32>
    %65 = arith.mulf %60, %64 : vector<4x8x8xf32>
    %66 = arith.truncf %65 : vector<4x8x8xf32> to vector<4x8x8xbf16>
    "tpu.trace_start"() <{level = 10 : i32, message = "hqk,hkd->hqd"}> : () -> ()
    %cst_30 = arith.constant dense<0.000000e+00> : vector<4x8x8xf32>
    %67 = tpu.matmul %66, %51, %cst_30 {dimension_numbers = #tpu.dot_dimension_numbers<[2], [1], [1], [2], [0, 0, 0, 1, 1, 2], [0], [0]>} : vector<4x8x8xbf16>, vector<4x8x8xbf16>, vector<4x8x8xf32> -> vector<4x8x8xf32>
    "tpu.trace_stop"() : () -> ()
    %68 = arith.truncf %67 : vector<4x8x8xf32> to vector<4x8x8xbf16>
    %c0_31 = arith.constant 0 : index
    %c0_32 = arith.constant 0 : index
    %c0_33 = arith.constant 0 : index
    %69 = vector.load %arg6[%c0_31, %c0_32, %c0_33] : memref<4x8x32xbf16, #tpu.memory_space<vmem>>, vector<4x8x32xbf16>
    "tpu.trace_start"() <{level = 10 : i32, message = "hqd,hde->hqe"}> : () -> ()
    %cst_34 = arith.constant dense<0.000000e+00> : vector<4x8x32xf32>
    %70 = tpu.matmul %68, %69, %cst_34 {dimension_numbers = #tpu.dot_dimension_numbers<[2], [1], [1], [2], [0, 0, 0, 1, 1, 2], [0], [0]>} : vector<4x8x8xbf16>, vector<4x8x32xbf16>, vector<4x8x32xf32> -> vector<4x8x32xf32>
    "tpu.trace_stop"() : () -> ()
    %cst_35 = arith.constant dense<0.000000e+00> : vector<8x32xf32>
    %71 = vector.multi_reduction <add>, %70, %cst_35 [0] : vector<4x8x32xf32> to vector<8x32xf32>
    %72 = vector.broadcast %6 : vector<1x32xf32> to vector<8x32xf32>
    %73 = arith.addf %71, %72 : vector<8x32xf32>
    %74 = arith.addf %1, %73 : vector<8x32xf32>
    %cst_36 = arith.constant dense<0.000000e+00> : vector<8xf32>
    %75 = vector.multi_reduction <add>, %74, %cst_36 [1] : vector<8x32xf32> to vector<8xf32>
    %76 = vector.shape_cast %75 : vector<8xf32> to vector<8x1xf32>
    %cst_37 = arith.constant 3.200000e+01 : f32
    %77 = vector.broadcast %cst_37 : f32 to vector<8x1xf32>
    %78 = arith.divf %76, %77 : vector<8x1xf32>
    %79 = vector.broadcast %78 : vector<8x1xf32> to vector<8x32xf32>
    %80 = arith.subf %74, %79 : vector<8x32xf32>
    %81 = arith.mulf %80, %80 : vector<8x32xf32>
    %cst_38 = arith.constant dense<0.000000e+00> : vector<8xf32>
    %82 = vector.multi_reduction <add>, %81, %cst_38 [1] : vector<8x32xf32> to vector<8xf32>
    %83 = vector.shape_cast %82 : vector<8xf32> to vector<8x1xf32>
    %cst_39 = arith.constant 3.200000e+01 : f32
    %84 = vector.broadcast %cst_39 : f32 to vector<8x1xf32>
    %85 = arith.divf %83, %84 : vector<8x1xf32>
    %86 = vector.broadcast %78 : vector<8x1xf32> to vector<8x32xf32>
    %87 = arith.subf %74, %86 : vector<8x32xf32>
    %cst_40 = arith.constant 9.99999974E-6 : f32
    %88 = vector.broadcast %cst_40 : f32 to vector<8x1xf32>
    %89 = arith.addf %85, %88 : vector<8x1xf32>
    %90 = math.rsqrt %89 : vector<8x1xf32>
    %91 = vector.broadcast %90 : vector<8x1xf32> to vector<8x32xf32>
    %92 = arith.mulf %87, %91 : vector<8x32xf32>
    %93 = vector.broadcast %4 : vector<1x32xf32> to vector<8x32xf32>
    %94 = arith.mulf %92, %93 : vector<8x32xf32>
    %95 = vector.broadcast %5 : vector<1x32xf32> to vector<8x32xf32>
    %96 = arith.addf %94, %95 : vector<8x32xf32>
    %97 = arith.truncf %96 : vector<8x32xf32> to vector<8x32xbf16>
    %c0_41 = arith.constant 0 : index
    %c0_42 = arith.constant 0 : index
    %98 = vector.load %arg7[%c0_41, %c0_42] : memref<32x64xbf16, #tpu.memory_space<vmem>>, vector<32x64xbf16>
    %cst_43 = arith.constant dense<0.000000e+00> : vector<8x64xf32>
    %99 = tpu.matmul %97, %98, %cst_43 {dimension_numbers = #tpu.dot_dimension_numbers<[1], [0], [0], [1], [0, 0, 1, 1], [], []>} : vector<8x32xbf16>, vector<32x64xbf16>, vector<8x64xf32> -> vector<8x64xf32>
    %100 = vector.broadcast %8 : vector<1x64xf32> to vector<8x64xf32>
    %101 = arith.addf %99, %100 : vector<8x64xf32>
    %cst_44 = arith.constant 0.000000e+00 : f32
    %102 = vector.broadcast %cst_44 : f32 to vector<8x64xf32>
    %103 = arith.maximumf %101, %102 : vector<8x64xf32>
    %104 = arith.truncf %103 : vector<8x64xf32> to vector<8x64xbf16>
    %c0_45 = arith.constant 0 : index
    %c0_46 = arith.constant 0 : index
    %105 = vector.load %arg8[%c0_45, %c0_46] : memref<64x32xbf16, #tpu.memory_space<vmem>>, vector<64x32xbf16>
    %cst_47 = arith.constant dense<0.000000e+00> : vector<8x32xf32>
    %106 = tpu.matmul %104, %105, %cst_47 {dimension_numbers = #tpu.dot_dimension_numbers<[1], [0], [0], [1], [0, 0, 1, 1], [], []>} : vector<8x64xbf16>, vector<64x32xbf16>, vector<8x32xf32> -> vector<8x32xf32>
    %107 = vector.broadcast %7 : vector<1x32xf32> to vector<8x32xf32>
    %108 = arith.addf %106, %107 : vector<8x32xf32>
    %109 = arith.addf %74, %108 : vector<8x32xf32>
    %c0_48 = arith.constant 0 : index
    %c0_49 = arith.constant 0 : index
    %c0_50 = arith.constant 0 : index
    %110 = vector.load %arg9[%c0_48, %c0_49, %c0_50] : memref<1x8x32xf32, #tpu.memory_space<vmem>>, vector<1x8x32xf32>
    %111 = vector.shape_cast %110 : vector<1x8x32xf32> to vector<8x32xf32>
    %112 = vector.shape_cast %109 : vector<8x32xf32> to vector<1x8x32xf32>
    tpu.vector_store %arg9[%c0_48, %c0_49, %c0_50], %112 {strides = array<i32>} : memref<1x8x32xf32, #tpu.memory_space<vmem>>, vector<1x8x32xf32>,
    return
  }
  func.func @transform_0(%arg0: i32) -> (i32, i32, i32) {
    %c0_i32 = arith.constant 0 : i32
    %c0_i32_0 = arith.constant 0 : i32
    %c0_i32_1 = arith.constant 0 : i32
    return %arg0, %c0_i32, %c0_i32_0 : i32, i32, i32
  }
  func.func @transform_1(%arg0: i32) -> (i32, i32, i32) {
    %c0_i32 = arith.constant 0 : i32
    %c0_i32_0 = arith.constant 0 : i32
    %c0_i32_1 = arith.constant 0 : i32
    return %arg0, %c0_i32, %c0_i32_0 : i32, i32, i32
  }
  func.func @transform_2(%arg0: i32) -> (i32, i32) {
    %c0_i32 = arith.constant 0 : i32
    %c0_i32_0 = arith.constant 0 : i32
    %c0_i32_1 = arith.constant 0 : i32
    return %c0_i32, %c0_i32_0 : i32, i32
  }
  func.func @transform_3(%arg0: i32) -> (i32, i32, i32) {
    %c0_i32 = arith.constant 0 : i32
    %c0_i32_0 = arith.constant 0 : i32
    %c0_i32_1 = arith.constant 0 : i32
    %c0_i32_2 = arith.constant 0 : i32
    return %c0_i32, %c0_i32_0, %c0_i32_1 : i32, i32, i32
  }
  func.func @transform_4(%arg0: i32) -> (i32, i32, i32) {
    %c0_i32 = arith.constant 0 : i32
    %c0_i32_0 = arith.constant 0 : i32
    %c0_i32_1 = arith.constant 0 : i32
    %c0_i32_2 = arith.constant 0 : i32
    return %c0_i32, %c0_i32_0, %c0_i32_1 : i32, i32, i32
  }
  func.func @transform_5(%arg0: i32) -> (i32, i32, i32) {
    %c0_i32 = arith.constant 0 : i32
    %c0_i32_0 = arith.constant 0 : i32
    %c0_i32_1 = arith.constant 0 : i32
    %c0_i32_2 = arith.constant 0 : i32
    return %c0_i32, %c0_i32_0, %c0_i32_1 : i32, i32, i32
  }
  func.func @transform_6(%arg0: i32) -> (i32, i32) {
    %c0_i32 = arith.constant 0 : i32
    %c0_i32_0 = arith.constant 0 : i32
    %c0_i32_1 = arith.constant 0 : i32
    return %c0_i32, %c0_i32_0 : i32, i32
  }
  func.func @transform_7(%arg0: i32) -> (i32, i32) {
    %c0_i32 = arith.constant 0 : i32
    %c0_i32_0 = arith.constant 0 : i32
    %c0_i32_1 = arith.constant 0 : i32
    return %c0_i32, %c0_i32_0 : i32, i32
  }
  func.func @transform_8(%arg0: i32) -> (i32, i32, i32) {
    %c0_i32 = arith.constant 0 : i32
    %c0_i32_0 = arith.constant 0 : i32
    %c0_i32_1 = arith.constant 0 : i32
    return %arg0, %c0_i32, %c0_i32_0 : i32, i32, i32
  }
}

</mosaic_0001>

<llo_original>
// kernel: encoder_layer.1
$region0: #{encoder_layer.1}
  #allocation0 [shape = 'u32[]', space=smem, size = 0x4, offset = 0x4, fixed_abs, tag = 'smem constant byte address 0x4 - core index']
  #allocation1 [shape = 'u32[144,128]{1,0:T(1,128)}', space=vmem, size = 0x12000, scoped, tag = 'internal scratch']
  %s0 = inlined_call_operand.vmem [shape: f32[2,8,32], index: 0, kind: input, shape index: {}]
  %s1 = inlined_call_operand.vmem [shape: f32[2,1,8], index: 1, kind: input, shape index: {}]
  %s2 = inlined_call_operand.vmem [shape: f32[8,128], index: 2, kind: input, shape index: {}]
  %s3 = inlined_call_operand.vmem [shape: bf16[12,32,8], index: 3, kind: input, shape index: {}]
  %s4 = inlined_call_operand.vmem [shape: f32[12,1,8], index: 4, kind: input, shape index: {}]
  %s5 = inlined_call_operand.vmem [shape: bf16[4,8,32], index: 5, kind: input, shape index: {}]
  %s6 = inlined_call_operand.vmem [shape: bf16[32,64], index: 6, kind: input, shape index: {}]
  %s7 = inlined_call_operand.vmem [shape: bf16[64,32], index: 7, kind: input, shape index: {}]
  %s8 = inlined_call_operand.hbm [shape: f32[2,8,32], index: 8, kind: output, shape index: {}]
  %s9 = sld [smem:[#allocation0]]
  $region65: #{encoder_layer.1} parent=0
    _
  %s11 = ssub.s32 1, %s9
  %s12 = scalar_select 0, %s11, %s9
  $region1: #{encoder_layer.1} parent=0
    #allocation2 [shape = 'u8[8192]{0}', space=vmem, size = 0x2000, scoped, tag = 'output window, operand 0']
    #allocation3 [shape = 's32[2]{0}', space=sflag, size = 0x8, scoped, tag = 'scoped memory for encoder_layer.1']
    %13 = vsyncpa [#allocation3], 0
    %s14 = scalar_lea.sflag [#allocation3], 1
    %15 = vsyncpa %s14, 0
    loop: start=0, step=1, limit=4
    $region2: #{encoder_layer.1} parent=1 // loop_pre_header
      _
    $region3: #{encoder_layer.1} parent=1 // loop_header
      %s17 = sphi 0, %s21
      %p18 = scmp.ge.s32.totalorder %s17, 4
      %s27 = sphi 0, %s29
      %s30 = sphi 0, %s27
      %s31 = sphi 0, %s30
      %s47 = sphi 0, %s31
      %s53 = sphi 0, %s55
      %s56 = sphi 0, %s53
      %s57 = sphi 0, %s56
      %s73 = sphi 0, %s57
      %s77 = sphi 0, %s77
      %s79 = sphi 0, %s77
      %s80 = sphi 0, %s79
      %s94 = sphi 0, %s80
      %s98 = sphi 0, %s98
      %s100 = sphi 0, %s98
      %s101 = sphi 0, %s100
      %s115 = sphi 0, %s101
      %s119 = sphi 0, %s119
      %s121 = sphi 0, %s119
      %s122 = sphi 0, %s121
      %s136 = sphi 0, %s122
      %s140 = sphi 0, %s140
      %s142 = sphi 0, %s140
      %s143 = sphi 0, %s142
      %s157 = sphi 0, %s143
      %s161 = sphi 0, %s161
      %s163 = sphi 0, %s161
      %s164 = sphi 0, %s163
      %s178 = sphi 0, %s164
      %s182 = sphi 0, %s182
      %s184 = sphi 0, %s182
      %s185 = sphi 0, %s184
      %s199 = sphi 0, %s185
      %s205 = sphi 0, %s207
      %s208 = sphi 0, %s205
      %s209 = sphi 0, %s208
      %s225 = sphi 0, %s209
    $region4: #{encoder_layer.1} parent=1 // loop_header_branch
      %20 = sbr.rel (%p18) target = $region8
    $region5: #{encoder_layer.1} parent=1 // loop_body
      %s22 = ssub.s32 %s17, 1
      %s23 = ssub.s32 %s17, 2
      %s24 = sadd.s32 %s17, 1
      %s25 = ssub.s32 %s17, %s24
      %p26 = scmp.eq.s32.totalorder %s25, 0
      %s28 = sadd.s32 %s27, 1
      %s29 = scalar_select %p26, %s27, %s28
      %p32 = pneg %p26
      %p33 = scmp.eq.s32.totalorder %s17, 1
      %p34 = por %p32, %p33
      %p35 = scmp.ne.s32.totalorder %s27, %s30
      %p36 = scmp.eq.s32.totalorder %s17, 0
      %p37 = por %p35, %p36
      %p38 = scmp.ne.s32.totalorder %s27, %s30
      %p39 = scmp.eq.s32.totalorder %s22, 1
      %p40 = por %p38, %p39
      %p41 = scmp.ne.s32.totalorder %s30, %s31
      %p42 = scmp.eq.s32.totalorder %s22, 0
      %p43 = por %p41, %p42
      %p44 = scmp.ne.s32.totalorder %s30, %s31
      %p45 = scmp.eq.s32.totalorder %s23, 1
      %p46 = por %p44, %p45
      %p48 = scmp.ne.s32.totalorder %s31, %s47
      %p49 = scmp.eq.s32.totalorder %s23, 0
      %p50 = por %p48, %p49
      %s51 = ssub.s32 %s17, %s24
      %p52 = scmp.eq.s32.totalorder %s51, 0
      %s54 = sadd.s32 %s53, 1
      %s55 = scalar_select %p52, %s53, %s54
      %p58 = pneg %p52
      %p59 = scmp.eq.s32.totalorder %s17, 1
      %p60 = por %p58, %p59
      %p61 = scmp.ne.s32.totalorder %s53, %s56
      %p62 = scmp.eq.s32.totalorder %s17, 0
      %p63 = por %p61, %p62
      %p64 = scmp.ne.s32.totalorder %s53, %s56
      %p65 = scmp.eq.s32.totalorder %s22, 1
      %p66 = por %p64, %p65
      %p67 = scmp.ne.s32.totalorder %s56, %s57
      %p68 = scmp.eq.s32.totalorder %s22, 0
      %p69 = por %p67, %p68
      %p70 = scmp.ne.s32.totalorder %s56, %s57
      %p71 = scmp.eq.s32.totalorder %s23, 1
      %p72 = por %p70, %p71
      %p74 = scmp.ne.s32.totalorder %s57, %s73
      %p75 = scmp.eq.s32.totalorder %s23, 0
      %p76 = por %p74, %p75
      %s78 = sadd.s32 %s77, 1
      %p81 = scmp.eq.s32.totalorder %s17, 1
      %p82 = scmp.ne.s32.totalorder %s77, %s79
      %p83 = scmp.eq.s32.totalorder %s17, 0
      %p84 = por %p82, %p83
      %p85 = scmp.ne.s32.totalorder %s77, %s79
      %p86 = scmp.eq.s32.totalorder %s22, 1
      %p87 = por %p85, %p86
      %p88 = scmp.ne.s32.totalorder %s79, %s80
      %p89 = scmp.eq.s32.totalorder %s22, 0
      %p90 = por %p88, %p89
      %p91 = scmp.ne.s32.totalorder %s79, %s80
      %p92 = scmp.eq.s32.totalorder %s23, 1
      %p93 = por %p91, %p92
      %p95 = scmp.ne.s32.totalorder %s80, %s94
      %p96 = scmp.eq.s32.totalorder %s23, 0
      %p97 = por %p95, %p96
      %s99 = sadd.s32 %s98, 1
      %p102 = scmp.eq.s32.totalorder %s17, 1
      %p103 = scmp.ne.s32.totalorder %s98, %s100
      %p104 = scmp.eq.s32.totalorder %s17, 0
      %p105 = por %p103, %p104
      %p106 = scmp.ne.s32.totalorder %s98, %s100
      %p107 = scmp.eq.s32.totalorder %s22, 1
      %p108 = por %p106, %p107
      %p109 = scmp.ne.s32.totalorder %s100, %s101
      %p110 = scmp.eq.s32.totalorder %s22, 0
      %p111 = por %p109, %p110
      %p112 = scmp.ne.s32.totalorder %s100, %s101
      %p113 = scmp.eq.s32.totalorder %s23, 1
      %p114 = por %p112, %p113
      %p116 = scmp.ne.s32.totalorder %s101, %s115
      %p117 = scmp.eq.s32.totalorder %s23, 0
      %p118 = por %p116, %p117
      %s120 = sadd.s32 %s119, 1
      %p123 = scmp.eq.s32.totalorder %s17, 1
      %p124 = scmp.ne.s32.totalorder %s119, %s121
      %p125 = scmp.eq.s32.totalorder %s17, 0
      %p126 = por %p124, %p125
      %p127 = scmp.ne.s32.totalorder %s119, %s121
      %p128 = scmp.eq.s32.totalorder %s22, 1
      %p129 = por %p127, %p128
      %p130 = scmp.ne.s32.totalorder %s121, %s122
      %p131 = scmp.eq.s32.totalorder %s22, 0
      %p132 = por %p130, %p131
      %p133 = scmp.ne.s32.totalorder %s121, %s122
      %p134 = scmp.eq.s32.totalorder %s23, 1
      %p135 = por %p133, %p134
      %p137 = scmp.ne.s32.totalorder %s122, %s136
      %p138 = scmp.eq.s32.totalorder %s23, 0
      %p139 = por %p137, %p138
      %s141 = sadd.s32 %s140, 1
      %p144 = scmp.eq.s32.totalorder %s17, 1
      %p145 = scmp.ne.s32.totalorder %s140, %s142
      %p146 = scmp.eq.s32.totalorder %s17, 0
      %p147 = por %p145, %p146
      %p148 = scmp.ne.s32.totalorder %s140, %s142
      %p149 = scmp.eq.s32.totalorder %s22, 1
      %p150 = por %p148, %p149
      %p151 = scmp.ne.s32.totalorder %s142, %s143
      %p152 = scmp.eq.s32.totalorder %s22, 0
      %p153 = por %p151, %p152
      %p154 = scmp.ne.s32.totalorder %s142, %s143
      %p155 = scmp.eq.s32.totalorder %s23, 1
      %p156 = por %p154, %p155
      %p158 = scmp.ne.s32.totalorder %s143, %s157
      %p159 = scmp.eq.s32.totalorder %s23, 0
      %p160 = por %p158, %p159
      %s162 = sadd.s32 %s161, 1
      %p165 = scmp.eq.s32.totalorder %s17, 1
      %p166 = scmp.ne.s32.totalorder %s161, %s163
      %p167 = scmp.eq.s32.totalorder %s17, 0
      %p168 = por %p166, %p167
      %p169 = scmp.ne.s32.totalorder %s161, %s163
      %p170 = scmp.eq.s32.totalorder %s22, 1
      %p171 = por %p169, %p170
      %p172 = scmp.ne.s32.totalorder %s163, %s164
      %p173 = scmp.eq.s32.totalorder %s22, 0
      %p174 = por %p172, %p173
      %p175 = scmp.ne.s32.totalorder %s163, %s164
      %p176 = scmp.eq.s32.totalorder %s23, 1
      %p177 = por %p175, %p176
      %p179 = scmp.ne.s32.totalorder %s164, %s178
      %p180 = scmp.eq.s32.totalorder %s23, 0
      %p181 = por %p179, %p180
      %s183 = sadd.s32 %s182, 1
      %p186 = scmp.eq.s32.totalorder %s17, 1
      %p187 = scmp.ne.s32.totalorder %s182, %s184
      %p188 = scmp.eq.s32.totalorder %s17, 0
      %p189 = por %p187, %p188
      %p190 = scmp.ne.s32.totalorder %s182, %s184
      %p191 = scmp.eq.s32.totalorder %s22, 1
      %p192 = por %p190, %p191
      %p193 = scmp.ne.s32.totalorder %s184, %s185
      %p194 = scmp.eq.s32.totalorder %s22, 0
      %p195 = por %p193, %p194
      %p196 = scmp.ne.s32.totalorder %s184, %s185
      %p197 = scmp.eq.s32.totalorder %s23, 1
      %p198 = por %p196, %p197
      %p200 = scmp.ne.s32.totalorder %s185, %s199
      %p201 = scmp.eq.s32.totalorder %s23, 0
      %p202 = por %p200, %p201
      %s203 = ssub.s32 %s17, %s24
      %p204 = scmp.eq.s32.totalorder %s203, 0
      %s206 = sadd.s32 %s205, 1
      %s207 = scalar_select %p204, %s205, %s206
      %p210 = pneg %p204
      %p211 = scmp.eq.s32.totalorder %s17, 1
      %p212 = por %p210, %p211
      %p213 = scmp.ne.s32.totalorder %s205, %s208
      %p214 = scmp.eq.s32.totalorder %s17, 0
      %p215 = por %p213, %p214
      %p216 = scmp.ne.s32.totalorder %s205, %s208
      %p217 = scmp.eq.s32.totalorder %s22, 1
      %p218 = por %p216, %p217
      %p219 = scmp.ne.s32.totalorder %s208, %s209
      %p220 = scmp.eq.s32.totalorder %s22, 0
      %p221 = por %p219, %p220
      %p222 = scmp.ne.s32.totalorder %s208, %s209
      %p223 = scmp.eq.s32.totalorder %s23, 1
      %p224 = por %p222, %p223
      %p226 = scmp.ne.s32.totalorder %s209, %s225
      %p227 = scmp.eq.s32.totalorder %s23, 0
      %p228 = por %p226, %p227
      %p229 = scmp.le.s32.totalorder 1, %s17
      %p230 = scmp.lt.s32.totalorder %s17, 3
      %p231 = pnand %p229, %p230
      %p232 = pneg %p231
      // Predicated region
      $region9: #{encoder_layer.1} parent=5 // pred_check
        _
      $region10: #{encoder_layer.1} parent=5 // pred_check_branch
        %234 = sbr.rel (%p231) target = $region12
      $region11: #{encoder_layer.1} parent=5 // pred_region
        %s235 = ssub.s32 %s17, 1
        // Predicated region
        $region13: #{encoder_layer.1} parent=11 // pred_check
          %p236 = pneg %p90
        $region14: #{encoder_layer.1} parent=11 // pred_check_branch
          %238 = sbr.rel (%p236) target = $region16
        $region15: #{encoder_layer.1} parent=11 // pred_region
          _
        $region16: #{encoder_layer.1} parent=11 // pred_fallthru
          _
        // Predicated region
        $region17: #{encoder_layer.1} parent=11 // pred_check
          %p239 = pneg %p111
        $region18: #{encoder_layer.1} parent=11 // pred_check_branch
          %241 = sbr.rel (%p239) target = $region20
        $region19: #{encoder_layer.1} parent=11 // pred_region
          _
        $region20: #{encoder_layer.1} parent=11 // pred_fallthru
          _
        // Predicated region
        $region21: #{encoder_layer.1} parent=11 // pred_check
          %p242 = pneg %p132
        $region22: #{encoder_layer.1} parent=11 // pred_check_branch
          %244 = sbr.rel (%p242) target = $region24
        $region23: #{encoder_layer.1} parent=11 // pred_region
          _
        $region24: #{encoder_layer.1} parent=11 // pred_fallthru
          _
        // Predicated region
        $region25: #{encoder_layer.1} parent=11 // pred_check
          %p245 = pneg %p153
        $region26: #{encoder_layer.1} parent=11 // pred_check_branch
          %247 = sbr.rel (%p245) target = $region28
        $region27: #{encoder_layer.1} parent=11 // pred_region
          _
        $region28: #{encoder_layer.1} parent=11 // pred_fallthru
          _
        // Predicated region
        $region29: #{encoder_layer.1} parent=11 // pred_check
          %p248 = pneg %p174
        $region30: #{encoder_layer.1} parent=11 // pred_check_branch
          %250 = sbr.rel (%p248) target = $region32
        $region31: #{encoder_layer.1} parent=11 // pred_region
          _
        $region32: #{encoder_layer.1} parent=11 // pred_fallthru
          _
        // Predicated region
        $region33: #{encoder_layer.1} parent=11 // pred_check
          %p251 = pneg %p195
        $region34: #{encoder_layer.1} parent=11 // pred_check_branch
          %253 = sbr.rel (%p251) target = $region36
        $region35: #{encoder_layer.1} parent=11 // pred_region
          _
        $region36: #{encoder_layer.1} parent=11 // pred_fallthru
          _
      $region12: #{encoder_layer.1} parent=5 // pred_fallthru
        _
      %p254 = scmp.lt.s32.totalorder %s17, 2
      // Predicated region
      $region37: #{encoder_layer.1} parent=5 // pred_check
        %p255 = pneg %p254
      $region38: #{encoder_layer.1} parent=5 // pred_check_branch
        %257 = sbr.rel (%p255) target = $region40
      $region39: #{encoder_layer.1} parent=5 // pred_region
        // Predicated region
        $region41: #{encoder_layer.1} parent=39 // pred_check
          %p258 = pneg %p37
        $region42: #{encoder_layer.1} parent=39 // pred_check_branch
          %260 = sbr.rel (%p258) target = $region44
        $region43: #{encoder_layer.1} parent=39 // pred_region
          %p261 = scmp.lt.s32.totalorder %s17, 1
          %s262 = scalar_select %p261, %s17, 1
          %s263 = smul.addr %s262, 8
          %s264 = scalar_lea.vmem %s0, %s263
        $region44: #{encoder_layer.1} parent=39 // pred_fallthru
          _
        // Predicated region
        $region45: #{encoder_layer.1} parent=39 // pred_check
          %p265 = pneg %p63
        $region46: #{encoder_layer.1} parent=39 // pred_check_branch
          %267 = sbr.rel (%p265) target = $region48
        $region47: #{encoder_layer.1} parent=39 // pred_region
          %p268 = scmp.lt.s32.totalorder %s17, 1
          %s269 = scalar_select %p268, %s17, 1
          %s270 = scalar_lea.vmem %s1, %s269
        $region48: #{encoder_layer.1} parent=39 // pred_fallthru
          _
      $region40: #{encoder_layer.1} parent=5 // pred_fallthru
        _
      %p271 = scmp.le.s32.totalorder 1, %s17
      %p272 = scmp.lt.s32.totalorder %s17, 3
      %p273 = pnand %p271, %p272
      %p274 = pneg %p273
      // Predicated region
      $region49: #{encoder_layer.1} parent=5 // pred_check
        _
      $region50: #{encoder_layer.1} parent=5 // pred_check_branch
        %276 = sbr.rel (%p273) target = $region52
      $region51: #{encoder_layer.1} parent=5 // pred_region
        %s277 = ssub.s32 %s17, 1
        %p278 = scmp.lt.s32.totalorder %s22, 1
        %s279 = scalar_select %p278, %s22, 1
        %s280 = smul.addr %s279, 8
        %s281 = scalar_lea.vmem %s0, %s280
        %p282 = pneg %p43
        %p283 = pneg %p40
        %p284 = scmp.lt.s32.totalorder %s22, 1
        %s285 = scalar_select %p284, %s22, 1
        %s286 = scalar_lea.vmem %s1, %s285
        %p287 = pneg %p69
        %p288 = pneg %p66
        %p289 = pneg %p90
        %p290 = pneg %p87
        %p291 = pneg %p111
        %p292 = pneg %p108
        %p293 = pneg %p132
        %p294 = pneg %p129
        %p295 = pneg %p153
        %p296 = pneg %p150
        %p297 = pneg %p174
        %p298 = pneg %p171
        %p299 = pneg %p195
        %p300 = pneg %p192
        %p301 = pneg %p221
        %p302 = pneg %p218
        %s303 = sand.u32 %s208, 1
        %s304 = scalar_lea.sflag [#allocation3], %s303
        %s305 = sand.u32 %s208, 1
        %s306 = smul.addr %s305, 8
        %s307 = scalar_lea.vmem [#allocation2], %s306
        %p308 = scmp.lt.s32.totalorder %s22, 1
        %s309 = scalar_select %p308, %s22, 1
        %s310 = smul.addr %s309, 8
        %s311 = scalar_lea.vmem %s0, %s310
        %p312 = scmp.lt.s32.totalorder %s22, 1
        %s313 = scalar_select %p312, %s22, 1
        %s314 = scalar_lea.vmem %s1, %s313
        %v316 = vld [vmem:[%s311] sm:$0xff]
        %v317 = vld [vmem:[%s2] sm:$0x1]
        %v318 = vld [vmem:[%s2 + $0x1] sm:$0x1]
        %v319 = vld [vmem:[%s2 + $0x2] sm:$0x1]
        %v320 = vld [vmem:[%s2 + $0x3] sm:$0x1]
        %v321 = vld [vmem:[%s2 + $0x4] sm:$0x1]
        %v322 = vld [vmem:[%s2 + $0x5] sm:$0x1]
        %v323 = vld [vmem:[%s2 + $0x6] sm:$0x1]
        %v324 = vld [vmem:[%s314] sm:$0x1]
        %vm325 = vcmp.eq.f32.partialorder %v324, 0.0
        %v326 = vsel %vm325, -1e+09, 0.0
        %vm327 = vcmask 261120
        %v328 = vsel %vm327, %v316, 0.0
        %329 = vadd.xlane.f32.xlu0 %v328
        %v330 = vpop.xlane.xlu0 %329
        %v331 = vrcp.pop 32.0
        %v332 = vmul.f32 %v330, %v331
        %v333 = vsub.f32 %v316, %v332
        %v334 = vmul.f32 %v333, %v333
        %v335 = vsel %vm327, %v334, 0.0
        %336 = vadd.xlane.f32.xlu0 %v335
        %v337 = vpop.xlane.xlu0 %336
        %v338 = vmul.f32 %v337, %v331
        %v339 = vadd.f32 %v338, 1e-05
        %v340 = vrsqrt.pop %v339
        %v341 = vmul.f32 %v333, %v340
        %v342 = vlaneseq
        %v343 = vshrl.u32 %v342, 7
        %v344 = vsub.s32 0, %v343
        %v345 = vrot.slane %v317, %v344
        %v346 = vmul.f32 %v341, %v345
        %v347 = vlaneseq
        %v348 = vshrl.u32 %v347, 7
        %v349 = vsub.s32 0, %v348
        %v350 = vrot.slane %v318, %v349
        %v351 = vadd.f32 %v346, %v350
        %v352 = vpack.c.bf16 %v351, %v351
        %v353 = vld [vmem:[%s3] sm:$0xf]
        %v354 = vld [vmem:[%s3 + $0x4] sm:$0xf]
        %v355 = vld [vmem:[%s3 + $0x8] sm:$0xf]
        %v356 = vld [vmem:[%s3 + $0xc] sm:$0xf]
        %v357 = vld [vmem:[%s3 + $0x10] sm:$0xf]
        %v358 = vld [vmem:[%s3 + $0x14] sm:$0xf]
        %v359 = vld [vmem:[%s3 + $0x18] sm:$0xf]
        %v360 = vld [vmem:[%s3 + $0x1c] sm:$0xf]
        %v361 = vld [vmem:[%s3 + $0x20] sm:$0xf]
        %v362 = vld [vmem:[%s3 + $0x24] sm:$0xf]
        %v363 = vld [vmem:[%s3 + $0x28] sm:$0xf]
        %v364 = vld [vmem:[%s3 + $0x2c] sm:$0xf]
        %v365 = vld [vmem:[%s3 + $0x30] sm:$0xf]
        %v366 = vld [vmem:[%s3 + $0x34] sm:$0xf]
        %v367 = vld [vmem:[%s3 + $0x38] sm:$0xf]
        %v368 = vld [vmem:[%s3 + $0x3c] sm:$0xf]
        %v369 = vld [vmem:[%s3 + $0x40] sm:$0xf]
        %v370 = vld [vmem:[%s3 + $0x44] sm:$0xf]
        %v371 = vld [vmem:[%s3 + $0x48] sm:$0xf]
        %v372 = vld [vmem:[%s3 + $0x4c] sm:$0xf]
        %v373 = vld [vmem:[%s3 + $0x50] sm:$0xf]
        %v374 = vld [vmem:[%s3 + $0x54] sm:$0xf]
        %v375 = vld [vmem:[%s3 + $0x58] sm:$0xf]
        %v376 = vld [vmem:[%s3 + $0x5c] sm:$0xf]
        %v377 = vld [vmem:[%s3 + $0x60] sm:$0xf]
        %v378 = vld [vmem:[%s3 + $0x64] sm:$0xf]
        %v379 = vld [vmem:[%s3 + $0x68] sm:$0xf]
        %v380 = vld [vmem:[%s3 + $0x6c] sm:$0xf]
        %v381 = vld [vmem:[%s3 + $0x70] sm:$0xf]
        %v382 = vld [vmem:[%s3 + $0x74] sm:$0xf]
        %v383 = vld [vmem:[%s3 + $0x78] sm:$0xf]
        %v384 = vld [vmem:[%s3 + $0x7c] sm:$0xf]
        %v385 = vld [vmem:[%s3 + $0x80] sm:$0xf]
        %v386 = vld [vmem:[%s3 + $0x84] sm:$0xf]
        %v387 = vld [vmem:[%s3 + $0x88] sm:$0xf]
        %v388 = vld [vmem:[%s3 + $0x8c] sm:$0xf]
        %v389 = vld [vmem:[%s3 + $0x90] sm:$0xf]
        %v390 = vld [vmem:[%s3 + $0x94] sm:$0xf]
        %v391 = vld [vmem:[%s3 + $0x98] sm:$0xf]
        %v392 = vld [vmem:[%s3 + $0x9c] sm:$0xf]
        %v393 = vld [vmem:[%s3 + $0xa0] sm:$0xf]
        %v394 = vld [vmem:[%s3 + $0xa4] sm:$0xf]
        %v395 = vld [vmem:[%s3 + $0xa8] sm:$0xf]
        %v396 = vld [vmem:[%s3 + $0xac] sm:$0xf]
        %v397 = vld [vmem:[%s3 + $0xb0] sm:$0xf]
        %v398 = vld [vmem:[%s3 + $0xb4] sm:$0xf]
        %v399 = vld [vmem:[%s3 + $0xb8] sm:$0xf]
        %v400 = vld [vmem:[%s3 + $0xbc] sm:$0xf]
        %v401 = vld [vmem:[%s4] sm:$0x1]
        %v402 = vld [vmem:[%s4 + $0x1] sm:$0x1]
        %v403 = vld [vmem:[%s4 + $0x2] sm:$0x1]
        %v404 = vld [vmem:[%s4 + $0x3] sm:$0x1]
        %v405 = vld [vmem:[%s4 + $0x4] sm:$0x1]
        %v406 = vld [vmem:[%s4 + $0x5] sm:$0x1]
        %v407 = vld [vmem:[%s4 + $0x6] sm:$0x1]
        %v408 = vld [vmem:[%s4 + $0x7] sm:$0x1]
        %v409 = vld [vmem:[%s4 + $0x8] sm:$0x1]
        %v410 = vld [vmem:[%s4 + $0x9] sm:$0x1]
        %v411 = vld [vmem:[%s4 + $0xa] sm:$0x1]
        %v412 = vld [vmem:[%s4 + $0xb] sm:$0x1]
        %v425 = vlaneseq
        %v426 = vshrl.u32 %v425, 7
        %v427 = vsub.s32 0, %v426
        %v428 = vrot.slane %v401, %v427
        %v429 = vlaneseq
        %v430 = vshrl.u32 %v429, 7
        %v431 = vsub.s32 0, %v430
        %v432 = vrot.slane %v402, %v431
        %v433 = vlaneseq
        %v434 = vshrl.u32 %v433, 7
        %v435 = vsub.s32 0, %v434
        %v436 = vrot.slane %v403, %v435
        %v437 = vlaneseq
        %v438 = vshrl.u32 %v437, 7
        %v439 = vsub.s32 0, %v438
        %v440 = vrot.slane %v404, %v439
        %v441 = vlaneseq
        %v442 = vshrl.u32 %v441, 7
        %v443 = vsub.s32 0, %v442
        %v444 = vrot.slane %v405, %v443
        %v445 = vlaneseq
        %v446 = vshrl.u32 %v445, 7
        %v447 = vsub.s32 0, %v446
        %v448 = vrot.slane %v406, %v447
        %v449 = vlaneseq
        %v450 = vshrl.u32 %v449, 7
        %v451 = vsub.s32 0, %v450
        %v452 = vrot.slane %v407, %v451
        %v453 = vlaneseq
        %v454 = vshrl.u32 %v453, 7
        %v455 = vsub.s32 0, %v454
        %v456 = vrot.slane %v408, %v455
        %v457 = vlaneseq
        %v458 = vshrl.u32 %v457, 7
        %v459 = vsub.s32 0, %v458
        %v460 = vrot.slane %v409, %v459
        %v461 = vlaneseq
        %v462 = vshrl.u32 %v461, 7
        %v463 = vsub.s32 0, %v462
        %v464 = vrot.slane %v410, %v463
        %v465 = vlaneseq
        %v466 = vshrl.u32 %v465, 7
        %v467 = vsub.s32 0, %v466
        %v468 = vrot.slane %v411, %v467
        %v469 = vlaneseq
        %v470 = vshrl.u32 %v469, 7
        %v471 = vsub.s32 0, %v470
        %v472 = vrot.slane %v412, %v471
        %v489 = vunpack.c.l.b16 %v353
        %v490 = vunpack.c.l.b16 %v354
        %v491 = vunpack.c.l.b16 %v355
        %v492 = vunpack.c.l.b16 %v356
        %v493 = vpack.c.b16 %v490, %v489
        %v494 = vpack.c.b16 %v492, %v491
        %v498 = vsel %vm327, %v352, 0
        %500 = vmatprep.subr.bf16.mxu0 0
        %501 = vmatpush1.bf16.msra.mxu0 %v493
        %502 = vmatprep.subr.bf16.mxu0 0
        %503 = vmatpush1.bf16.msra.mxu0 %v494
        %504 = vmatprep.subr.bf16.mxu0 0
        %505 = vmatpush1.bf16.msra.mxu0 0
        %506 = vmatprep.subr.bf16.mxu0 0
        %507 = vmatpush1.bf16.msra.mxu0 0
        %508 = vmatprep.subr.bf16.mxu0 0
        %509 = vmatpush1.bf16.msra.mxu0 0
        %510 = vmatprep.subr.bf16.mxu0 0
        %511 = vmatpush1.bf16.msra.mxu0 0
        %512 = vmatprep.subr.bf16.mxu0 0
        %513 = vmatpush1.bf16.msra.mxu0 0
        %514 = vmatprep.subr.bf16.mxu0 0
        %515 = vmatpush1.bf16.msra.mxu0 0
        %516 = vmatprep.subr.bf16.mxu0 0
        %517 = vmatpush1.bf16.msra.mxu0 0
        %518 = vmatprep.subr.bf16.mxu0 0
        %519 = vmatpush1.bf16.msra.mxu0 0
        %520 = vmatprep.subr.bf16.mxu0 0
        %521 = vmatpush1.bf16.msra.mxu0 0
        %522 = vmatprep.subr.bf16.mxu0 0
        %523 = vmatpush1.bf16.msra.mxu0 0
        %524 = vmatprep.subr.bf16.mxu0 0
        %525 = vmatpush1.bf16.msra.mxu0 0
        %526 = vmatprep.subr.bf16.mxu0 0
        %527 = vmatpush1.bf16.msra.mxu0 0
        %528 = vmatprep.subr.bf16.mxu0 0
        %529 = vmatpush1.bf16.msra.mxu0 0
        %530 = vmatprep.subr.bf16.mxu0 0
        %531 = vmatpush1.bf16.msra.mxu0 0
        %532 = vmatprep.mubr.bf16.mxu0 0
        %533 = vmatmul.mubr.bf16.gmra.mrb[0].mxu0 %v498
        %v534 = vpop.f32.mrb[0].mxu0
        %v535 = vadd.f32 %v428, %v534
        %v536 = vpop.f32.mrb[0].mxu0
        %v537 = vpop.f32.mrb[0].mxu0
        %v538 = vpop.f32.mrb[0].mxu0
        %539 = vdwg.mxu0
        %v544 = vunpack.c.l.b16 %v357
        %v545 = vunpack.c.l.b16 %v358
        %v546 = vunpack.c.l.b16 %v359
        %v547 = vunpack.c.l.b16 %v360
        %v548 = vpack.c.b16 %v545, %v544
        %v549 = vpack.c.b16 %v547, %v546
        %552 = vmatprep.subr.bf16.mxu0 0
        %553 = vmatpush1.bf16.msra.mxu0 %v548
        %554 = vmatprep.subr.bf16.mxu0 0
        %555 = vmatpush1.bf16.msra.mxu0 %v549
        %556 = vmatprep.subr.bf16.mxu0 0
        %557 = vmatpush1.bf16.msra.mxu0 0
        %558 = vmatprep.subr.bf16.mxu0 0
        %559 = vmatpush1.bf16.msra.mxu0 0
        %560 = vmatprep.subr.bf16.mxu0 0
        %561 = vmatpush1.bf16.msra.mxu0 0
        %562 = vmatprep.subr.bf16.mxu0 0
        %563 = vmatpush1.bf16.msra.mxu0 0
        %564 = vmatprep.subr.bf16.mxu0 0
        %565 = vmatpush1.bf16.msra.mxu0 0
        %566 = vmatprep.subr.bf16.mxu0 0
        %567 = vmatpush1.bf16.msra.mxu0 0
        %568 = vmatprep.subr.bf16.mxu0 0
        %569 = vmatpush1.bf16.msra.mxu0 0
        %570 = vmatprep.subr.bf16.mxu0 0
        %571 = vmatpush1.bf16.msra.mxu0 0
        %572 = vmatprep.subr.bf16.mxu0 0
        %573 = vmatpush1.bf16.msra.mxu0 0
        %574 = vmatprep.subr.bf16.mxu0 0
        %575 = vmatpush1.bf16.msra.mxu0 0
        %576 = vmatprep.subr.bf16.mxu0 0
        %577 = vmatpush1.bf16.msra.mxu0 0
        %578 = vmatprep.subr.bf16.mxu0 0
        %579 = vmatpush1.bf16.msra.mxu0 0
        %580 = vmatprep.subr.bf16.mxu0 0
        %581 = vmatpush1.bf16.msra.mxu0 0
        %582 = vmatprep.subr.bf16.mxu0 0
        %583 = vmatpush1.bf16.msra.mxu0 0
        %584 = vmatprep.mubr.bf16.mxu0 0
        %585 = vmatmul.mubr.bf16.gmra.mrb[0].mxu0 %v498
        %v586 = vpop.f32.mrb[0].mxu0
        %v587 = vadd.f32 %v432, %v586
        %v588 = vpop.f32.mrb[0].mxu0
        %v589 = vpop.f32.mrb[0].mxu0
        %v590 = vpop.f32.mrb[0].mxu0
        %591 = vdwg.mxu0
        %v596 = vunpack.c.l.b16 %v361
        %v597 = vunpack.c.l.b16 %v362
        %v598 = vunpack.c.l.b16 %v363
        %v599 = vunpack.c.l.b16 %v364
        %v600 = vpack.c.b16 %v597, %v596
        %v601 = vpack.c.b16 %v599, %v598
        %604 = vmatprep.subr.bf16.mxu0 0
        %605 = vmatpush1.bf16.msra.mxu0 %v600
        %606 = vmatprep.subr.bf16.mxu0 0
        %607 = vmatpush1.bf16.msra.mxu0 %v601
        %608 = vmatprep.subr.bf16.mxu0 0
        %609 = vmatpush1.bf16.msra.mxu0 0
        %610 = vmatprep.subr.bf16.mxu0 0
        %611 = vmatpush1.bf16.msra.mxu0 0
        %612 = vmatprep.subr.bf16.mxu0 0
        %613 = vmatpush1.bf16.msra.mxu0 0
        %614 = vmatprep.subr.bf16.mxu0 0
        %615 = vmatpush1.bf16.msra.mxu0 0
        %616 = vmatprep.subr.bf16.mxu0 0
        %617 = vmatpush1.bf16.msra.mxu0 0
        %618 = vmatprep.subr.bf16.mxu0 0
        %619 = vmatpush1.bf16.msra.mxu0 0
        %620 = vmatprep.subr.bf16.mxu0 0
        %621 = vmatpush1.bf16.msra.mxu0 0
        %622 = vmatprep.subr.bf16.mxu0 0
        %623 = vmatpush1.bf16.msra.mxu0 0
        %624 = vmatprep.subr.bf16.mxu0 0
        %625 = vmatpush1.bf16.msra.mxu0 0
        %626 = vmatprep.subr.bf16.mxu0 0
        %627 = vmatpush1.bf16.msra.mxu0 0
        %628 = vmatprep.subr.bf16.mxu0 0
        %629 = vmatpush1.bf16.msra.mxu0 0
        %630 = vmatprep.subr.bf16.mxu0 0
        %631 = vmatpush1.bf16.msra.mxu0 0
        %632 = vmatprep.subr.bf16.mxu0 0
        %633 = vmatpush1.bf16.msra.mxu0 0
        %634 = vmatprep.subr.bf16.mxu0 0
        %635 = vmatpush1.bf16.msra.mxu0 0
        %636 = vmatprep.mubr.bf16.mxu0 0
        %637 = vmatmul.mubr.bf16.gmra.mrb[0].mxu0 %v498
        %v638 = vpop.f32.mrb[0].mxu0
        %v639 = vadd.f32 %v436, %v638
        %v640 = vpop.f32.mrb[0].mxu0
        %v641 = vpop.f32.mrb[0].mxu0
        %v642 = vpop.f32.mrb[0].mxu0
        %643 = vdwg.mxu0
        %v648 = vunpack.c.l.b16 %v365
        %v649 = vunpack.c.l.b16 %v366
        %v650 = vunpack.c.l.b16 %v367
        %v651 = vunpack.c.l.b16 %v368
        %v652 = vpack.c.b16 %v649, %v648
        %v653 = vpack.c.b16 %v651, %v650
        %656 = vmatprep.subr.bf16.mxu0 0
        %657 = vmatpush1.bf16.msra.mxu0 %v652
        %658 = vmatprep.subr.bf16.mxu0 0
        %659 = vmatpush1.bf16.msra.mxu0 %v653
        %660 = vmatprep.subr.bf16.mxu0 0
        %661 = vmatpush1.bf16.msra.mxu0 0
        %662 = vmatprep.subr.bf16.mxu0 0
        %663 = vmatpush1.bf16.msra.mxu0 0
        %664 = vmatprep.subr.bf16.mxu0 0
        %665 = vmatpush1.bf16.msra.mxu0 0
        %666 = vmatprep.subr.bf16.mxu0 0
        %667 = vmatpush1.bf16.msra.mxu0 0
        %668 = vmatprep.subr.bf16.mxu0 0
        %669 = vmatpush1.bf16.msra.mxu0 0
        %670 = vmatprep.subr.bf16.mxu0 0
        %671 = vmatpush1.bf16.msra.mxu0 0
        %672 = vmatprep.subr.bf16.mxu0 0
        %673 = vmatpush1.bf16.msra.mxu0 0
        %674 = vmatprep.subr.bf16.mxu0 0
        %675 = vmatpush1.bf16.msra.mxu0 0
        %676 = vmatprep.subr.bf16.mxu0 0
        %677 = vmatpush1.bf16.msra.mxu0 0
        %678 = vmatprep.subr.bf16.mxu0 0
        %679 = vmatpush1.bf16.msra.mxu0 0
        %680 = vmatprep.subr.bf16.mxu0 0
        %681 = vmatpush1.bf16.msra.mxu0 0
        %682 = vmatprep.subr.bf16.mxu0 0
        %683 = vmatpush1.bf16.msra.mxu0 0
        %684 = vmatprep.subr.bf16.mxu0 0
        %685 = vmatpush1.bf16.msra.mxu0 0
        %686 = vmatprep.subr.bf16.mxu0 0
        %687 = vmatpush1.bf16.msra.mxu0 0
        %688 = vmatprep.mubr.bf16.mxu0 0
        %689 = vmatmul.mubr.bf16.gmra.mrb[0].mxu0 %v498
        %v690 = vpop.f32.mrb[0].mxu0
        %v691 = vadd.f32 %v440, %v690
        %v692 = vpop.f32.mrb[0].mxu0
        %v693 = vpop.f32.mrb[0].mxu0
        %v694 = vpop.f32.mrb[0].mxu0
        %695 = vdwg.mxu0
        %v700 = vunpack.c.l.b16 %v369
        %v701 = vunpack.c.l.b16 %v370
        %v702 = vunpack.c.l.b16 %v371
        %v703 = vunpack.c.l.b16 %v372
        %v704 = vpack.c.b16 %v701, %v700
        %v705 = vpack.c.b16 %v703, %v702
        %708 = vmatprep.subr.bf16.mxu0 0
        %709 = vmatpush1.bf16.msra.mxu0 %v704
        %710 = vmatprep.subr.bf16.mxu0 0
        %711 = vmatpush1.bf16.msra.mxu0 %v705
        %712 = vmatprep.subr.bf16.mxu0 0
        %713 = vmatpush1.bf16.msra.mxu0 0
        %714 = vmatprep.subr.bf16.mxu0 0
        %715 = vmatpush1.bf16.msra.mxu0 0
        %716 = vmatprep.subr.bf16.mxu0 0
        %717 = vmatpush1.bf16.msra.mxu0 0
        %718 = vmatprep.subr.bf16.mxu0 0
        %719 = vmatpush1.bf16.msra.mxu0 0
        %720 = vmatprep.subr.bf16.mxu0 0
        %721 = vmatpush1.bf16.msra.mxu0 0
        %722 = vmatprep.subr.bf16.mxu0 0
        %723 = vmatpush1.bf16.msra.mxu0 0
        %724 = vmatprep.subr.bf16.mxu0 0
        %725 = vmatpush1.bf16.msra.mxu0 0
        %726 = vmatprep.subr.bf16.mxu0 0
        %727 = vmatpush1.bf16.msra.mxu0 0
        %728 = vmatprep.subr.bf16.mxu0 0
        %729 = vmatpush1.bf16.msra.mxu0 0
        %730 = vmatprep.subr.bf16.mxu0 0
        %731 = vmatpush1.bf16.msra.mxu0 0
        %732 = vmatprep.subr.bf16.mxu0 0
        %733 = vmatpush1.bf16.msra.mxu0 0
        %734 = vmatprep.subr.bf16.mxu0 0
        %735 = vmatpush1.bf16.msra.mxu0 0
        %736 = vmatprep.subr.bf16.mxu0 0
        %737 = vmatpush1.bf16.msra.mxu0 0
        %738 = vmatprep.subr.bf16.mxu0 0
        %739 = vmatpush1.bf16.msra.mxu0 0
        %740 = vmatprep.mubr.bf16.mxu0 0
        %741 = vmatmul.mubr.bf16.gmra.mrb[0].mxu0 %v498
        %v742 = vpop.f32.mrb[0].mxu0
        %v743 = vadd.f32 %v444, %v742
        %v744 = vpop.f32.mrb[0].mxu0
        %v745 = vpop.f32.mrb[0].mxu0
        %v746 = vpop.f32.mrb[0].mxu0
        %747 = vdwg.mxu0
        %v752 = vunpack.c.l.b16 %v373
        %v753 = vunpack.c.l.b16 %v374
        %v754 = vunpack.c.l.b16 %v375
        %v755 = vunpack.c.l.b16 %v376
        %v756 = vpack.c.b16 %v753, %v752
        %v757 = vpack.c.b16 %v755, %v754
        %760 = vmatprep.subr.bf16.mxu0 0
        %761 = vmatpush1.bf16.msra.mxu0 %v756
        %762 = vmatprep.subr.bf16.mxu0 0
        %763 = vmatpush1.bf16.msra.mxu0 %v757
        %764 = vmatprep.subr.bf16.mxu0 0
        %765 = vmatpush1.bf16.msra.mxu0 0
        %766 = vmatprep.subr.bf16.mxu0 0
        %767 = vmatpush1.bf16.msra.mxu0 0
        %768 = vmatprep.subr.bf16.mxu0 0
        %769 = vmatpush1.bf16.msra.mxu0 0
        %770 = vmatprep.subr.bf16.mxu0 0
        %771 = vmatpush1.bf16.msra.mxu0 0
        %772 = vmatprep.subr.bf16.mxu0 0
        %773 = vmatpush1.bf16.msra.mxu0 0
        %774 = vmatprep.subr.bf16.mxu0 0
        %775 = vmatpush1.bf16.msra.mxu0 0
        %776 = vmatprep.subr.bf16.mxu0 0
        %777 = vmatpush1.bf16.msra.mxu0 0
        %778 = vmatprep.subr.bf16.mxu0 0
        %779 = vmatpush1.bf16.msra.mxu0 0
        %780 = vmatprep.subr.bf16.mxu0 0
        %781 = vmatpush1.bf16.msra.mxu0 0
        %782 = vmatprep.subr.bf16.mxu0 0
        %783 = vmatpush1.bf16.msra.mxu0 0
        %784 = vmatprep.subr.bf16.mxu0 0
        %785 = vmatpush1.bf16.msra.mxu0 0
        %786 = vmatprep.subr.bf16.mxu0 0
        %787 = vmatpush1.bf16.msra.mxu0 0
        %788 = vmatprep.subr.bf16.mxu0 0
        %789 = vmatpush1.bf16.msra.mxu0 0
        %790 = vmatprep.subr.bf16.mxu0 0
        %791 = vmatpush1.bf16.msra.mxu0 0
        %792 = vmatprep.mubr.bf16.mxu0 0
        %793 = vmatmul.mubr.bf16.gmra.mrb[0].mxu0 %v498
        %v794 = vpop.f32.mrb[0].mxu0
        %v795 = vadd.f32 %v448, %v794
        %v796 = vpop.f32.mrb[0].mxu0
        %v797 = vpop.f32.mrb[0].mxu0
        %v798 = vpop.f32.mrb[0].mxu0
        %799 = vdwg.mxu0
        %v804 = vunpack.c.l.b16 %v377
        %v805 = vunpack.c.l.b16 %v378
        %v806 = vunpack.c.l.b16 %v379
        %v807 = vunpack.c.l.b16 %v380
        %v808 = vpack.c.b16 %v805, %v804
        %v809 = vpack.c.b16 %v807, %v806
        %812 = vmatprep.subr.bf16.mxu0 0
        %813 = vmatpush1.bf16.msra.mxu0 %v808
        %814 = vmatprep.subr.bf16.mxu0 0
        %815 = vmatpush1.bf16.msra.mxu0 %v809
        %816 = vmatprep.subr.bf16.mxu0 0
        %817 = vmatpush1.bf16.msra.mxu0 0
        %818 = vmatprep.subr.bf16.mxu0 0
        %819 = vmatpush1.bf16.msra.mxu0 0
        %820 = vmatprep.subr.bf16.mxu0 0
        %821 = vmatpush1.bf16.msra.mxu0 0
        %822 = vmatprep.subr.bf16.mxu0 0
        %823 = vmatpush1.bf16.msra.mxu0 0
        %824 = vmatprep.subr.bf16.mxu0 0
        %825 = vmatpush1.bf16.msra.mxu0 0
        %826 = vmatprep.subr.bf16.mxu0 0
        %827 = vmatpush1.bf16.msra.mxu0 0
        %828 = vmatprep.subr.bf16.mxu0 0
        %829 = vmatpush1.bf16.msra.mxu0 0
        %830 = vmatprep.subr.bf16.mxu0 0
        %831 = vmatpush1.bf16.msra.mxu0 0
        %832 = vmatprep.subr.bf16.mxu0 0
        %833 = vmatpush1.bf16.msra.mxu0 0
        %834 = vmatprep.subr.bf16.mxu0 0
        %835 = vmatpush1.bf16.msra.mxu0 0
        %836 = vmatprep.subr.bf16.mxu0 0
        %837 = vmatpush1.bf16.msra.mxu0 0
        %838 = vmatprep.subr.bf16.mxu0 0
        %839 = vmatpush1.bf16.msra.mxu0 0
        %840 = vmatprep.subr.bf16.mxu0 0
        %841 = vmatpush1.bf16.msra.mxu0 0
        %842 = vmatprep.subr.bf16.mxu0 0
        %843 = vmatpush1.bf16.msra.mxu0 0
        %844 = vmatprep.mubr.bf16.mxu0 0
        %845 = vmatmul.mubr.bf16.gmra.mrb[0].mxu0 %v498
        %v846 = vpop.f32.mrb[0].mxu0
        %v847 = vadd.f32 %v452, %v846
        %v848 = vpop.f32.mrb[0].mxu0
        %v849 = vpop.f32.mrb[0].mxu0
        %v850 = vpop.f32.mrb[0].mxu0
        %851 = vdwg.mxu0
        %v856 = vunpack.c.l.b16 %v381
        %v857 = vunpack.c.l.b16 %v382
        %v858 = vunpack.c.l.b16 %v383
        %v859 = vunpack.c.l.b16 %v384
        %v860 = vpack.c.b16 %v857, %v856
        %v861 = vpack.c.b16 %v859, %v858
        %864 = vmatprep.subr.bf16.mxu0 0
        %865 = vmatpush1.bf16.msra.mxu0 %v860
        %866 = vmatprep.subr.bf16.mxu0 0
        %867 = vmatpush1.bf16.msra.mxu0 %v861
        %868 = vmatprep.subr.bf16.mxu0 0
        %869 = vmatpush1.bf16.msra.mxu0 0
        %870 = vmatprep.subr.bf16.mxu0 0
        %871 = vmatpush1.bf16.msra.mxu0 0
        %872 = vmatprep.subr.bf16.mxu0 0
        %873 = vmatpush1.bf16.msra.mxu0 0
        %874 = vmatprep.subr.bf16.mxu0 0
        %875 = vmatpush1.bf16.msra.mxu0 0
        %876 = vmatprep.subr.bf16.mxu0 0
        %877 = vmatpush1.bf16.msra.mxu0 0
        %878 = vmatprep.subr.bf16.mxu0 0
        %879 = vmatpush1.bf16.msra.mxu0 0
        %880 = vmatprep.subr.bf16.mxu0 0
        %881 = vmatpush1.bf16.msra.mxu0 0
        %882 = vmatprep.subr.bf16.mxu0 0
        %883 = vmatpush1.bf16.msra.mxu0 0
        %884 = vmatprep.subr.bf16.mxu0 0
        %885 = vmatpush1.bf16.msra.mxu0 0
        %886 = vmatprep.subr.bf16.mxu0 0
        %887 = vmatpush1.bf16.msra.mxu0 0
        %888 = vmatprep.subr.bf16.mxu0 0
        %889 = vmatpush1.bf16.msra.mxu0 0
        %890 = vmatprep.subr.bf16.mxu0 0
        %891 = vmatpush1.bf16.msra.mxu0 0
        %892 = vmatprep.subr.bf16.mxu0 0
        %893 = vmatpush1.bf16.msra.mxu0 0
        %894 = vmatprep.subr.bf16.mxu0 0
        %895 = vmatpush1.bf16.msra.mxu0 0
        %896 = vmatprep.mubr.bf16.mxu0 0
        %897 = vmatmul.mubr.bf16.gmra.mrb[0].mxu0 %v498
        %v898 = vpop.f32.mrb[0].mxu0
        %v899 = vadd.f32 %v456, %v898
        %v900 = vpop.f32.mrb[0].mxu0
        %v901 = vpop.f32.mrb[0].mxu0
        %v902 = vpop.f32.mrb[0].mxu0
        %903 = vdwg.mxu0
        %v908 = vunpack.c.l.b16 %v385
        %v909 = vunpack.c.l.b16 %v386
        %v910 = vunpack.c.l.b16 %v387
        %v911 = vunpack.c.l.b16 %v388
        %v912 = vpack.c.b16 %v909, %v908
        %v913 = vpack.c.b16 %v911, %v910
        %916 = vmatprep.subr.bf16.mxu0 0
        %917 = vmatpush1.bf16.msra.mxu0 %v912
        %918 = vmatprep.subr.bf16.mxu0 0
        %919 = vmatpush1.bf16.msra.mxu0 %v913
        %920 = vmatprep.subr.bf16.mxu0 0
        %921 = vmatpush1.bf16.msra.mxu0 0
        %922 = vmatprep.subr.bf16.mxu0 0
        %923 = vmatpush1.bf16.msra.mxu0 0
        %924 = vmatprep.subr.bf16.mxu0 0
        %925 = vmatpush1.bf16.msra.mxu0 0
        %926 = vmatprep.subr.bf16.mxu0 0
        %927 = vmatpush1.bf16.msra.mxu0 0
        %928 = vmatprep.subr.bf16.mxu0 0
        %929 = vmatpush1.bf16.msra.mxu0 0
        %930 = vmatprep.subr.bf16.mxu0 0
        %931 = vmatpush1.bf16.msra.mxu0 0
        %932 = vmatprep.subr.bf16.mxu0 0
        %933 = vmatpush1.bf16.msra.mxu0 0
        %934 = vmatprep.subr.bf16.mxu0 0
        %935 = vmatpush1.bf16.msra.mxu0 0
        %936 = vmatprep.subr.bf16.mxu0 0
        %937 = vmatpush1.bf16.msra.mxu0 0
        %938 = vmatprep.subr.bf16.mxu0 0
        %939 = vmatpush1.bf16.msra.mxu0 0
        %940 = vmatprep.subr.bf16.mxu0 0
        %941 = vmatpush1.bf16.msra.mxu0 0
        %942 = vmatprep.subr.bf16.mxu0 0
        %943 = vmatpush1.bf16.msra.mxu0 0
        %944 = vmatprep.subr.bf16.mxu0 0
        %945 = vmatpush1.bf16.msra.mxu0 0
        %946 = vmatprep.subr.bf16.mxu0 0
        %947 = vmatpush1.bf16.msra.mxu0 0
        %948 = vmatprep.mubr.bf16.mxu0 0
        %949 = vmatmul.mubr.bf16.gmra.mrb[0].mxu0 %v498
        %v950 = vpop.f32.mrb[0].mxu0
        %v951 = vadd.f32 %v460, %v950
        %v952 = vpop.f32.mrb[0].mxu0
        %v953 = vpop.f32.mrb[0].mxu0
        %v954 = vpop.f32.mrb[0].mxu0
        %955 = vdwg.mxu0
        %v960 = vunpack.c.l.b16 %v389
        %v961 = vunpack.c.l.b16 %v390
        %v962 = vunpack.c.l.b16 %v391
        %v963 = vunpack.c.l.b16 %v392
        %v964 = vpack.c.b16 %v961, %v960
        %v965 = vpack.c.b16 %v963, %v962
        %968 = vmatprep.subr.bf16.mxu0 0
        %969 = vmatpush1.bf16.msra.mxu0 %v964
        %970 = vmatprep.subr.bf16.mxu0 0
        %971 = vmatpush1.bf16.msra.mxu0 %v965
        %972 = vmatprep.subr.bf16.mxu0 0
        %973 = vmatpush1.bf16.msra.mxu0 0
        %974 = vmatprep.subr.bf16.mxu0 0
        %975 = vmatpush1.bf16.msra.mxu0 0
        %976 = vmatprep.subr.bf16.mxu0 0
        %977 = vmatpush1.bf16.msra.mxu0 0
        %978 = vmatprep.subr.bf16.mxu0 0
        %979 = vmatpush1.bf16.msra.mxu0 0
        %980 = vmatprep.subr.bf16.mxu0 0
        %981 = vmatpush1.bf16.msra.mxu0 0
        %982 = vmatprep.subr.bf16.mxu0 0
        %983 = vmatpush1.bf16.msra.mxu0 0
        %984 = vmatprep.subr.bf16.mxu0 0
        %985 = vmatpush1.bf16.msra.mxu0 0
        %986 = vmatprep.subr.bf16.mxu0 0
        %987 = vmatpush1.bf16.msra.mxu0 0
        %988 = vmatprep.subr.bf16.mxu0 0
        %989 = vmatpush1.bf16.msra.mxu0 0
        %990 = vmatprep.subr.bf16.mxu0 0
        %991 = vmatpush1.bf16.msra.mxu0 0
        %992 = vmatprep.subr.bf16.mxu0 0
        %993 = vmatpush1.bf16.msra.mxu0 0
        %994 = vmatprep.subr.bf16.mxu0 0
        %995 = vmatpush1.bf16.msra.mxu0 0
        %996 = vmatprep.subr.bf16.mxu0 0
        %997 = vmatpush1.bf16.msra.mxu0 0
        %998 = vmatprep.subr.bf16.mxu0 0
        %999 = vmatpush1.bf16.msra.mxu0 0
        %1000 = vmatprep.mubr.bf16.mxu0 0
        %1001 = vmatmul.mubr.bf16.gmra.mrb[0].mxu0 %v498
        %v1002 = vpop.f32.mrb[0].mxu0
        %v1003 = vadd.f32 %v464, %v1002
        %v1004 = vpop.f32.mrb[0].mxu0
        %v1005 = vpop.f32.mrb[0].mxu0
        %v1006 = vpop.f32.mrb[0].mxu0
        %1007 = vdwg.mxu0
        %v1012 = vunpack.c.l.b16 %v393
        %v1013 = vunpack.c.l.b16 %v394
        %v1014 = vunpack.c.l.b16 %v395
        %v1015 = vunpack.c.l.b16 %v396
        %v1016 = vpack.c.b16 %v1013, %v1012
        %v1017 = vpack.c.b16 %v1015, %v1014
        %1020 = vmatprep.subr.bf16.mxu0 0
        %1021 = vmatpush1.bf16.msra.mxu0 %v1016
        %1022 = vmatprep.subr.bf16.mxu0 0
        %1023 = vmatpush1.bf16.msra.mxu0 %v1017
        %1024 = vmatprep.subr.bf16.mxu0 0
        %1025 = vmatpush1.bf16.msra.mxu0 0
        %1026 = vmatprep.subr.bf16.mxu0 0
        %1027 = vmatpush1.bf16.msra.mxu0 0
        %1028 = vmatprep.subr.bf16.mxu0 0
        %1029 = vmatpush1.bf16.msra.mxu0 0
        %1030 = vmatprep.subr.bf16.mxu0 0
        %1031 = vmatpush1.bf16.msra.mxu0 0
        %1032 = vmatprep.subr.bf16.mxu0 0
        %1033 = vmatpush1.bf16.msra.mxu0 0
        %1034 = vmatprep.subr.bf16.mxu0 0
        %1035 = vmatpush1.bf16.msra.mxu0 0
        %1036 = vmatprep.subr.bf16.mxu0 0
        %1037 = vmatpush1.bf16.msra.mxu0 0
        %1038 = vmatprep.subr.bf16.mxu0 0
        %1039 = vmatpush1.bf16.msra.mxu0 0
        %1040 = vmatprep.subr.bf16.mxu0 0
        %1041 = vmatpush1.bf16.msra.mxu0 0
        %1042 = vmatprep.subr.bf16.mxu0 0
        %1043 = vmatpush1.bf16.msra.mxu0 0
        %1044 = vmatprep.subr.bf16.mxu0 0
        %1045 = vmatpush1.bf16.msra.mxu0 0
        %1046 = vmatprep.subr.bf16.mxu0 0
        %1047 = vmatpush1.bf16.msra.mxu0 0
        %1048 = vmatprep.subr.bf16.mxu0 0
        %1049 = vmatpush1.bf16.msra.mxu0 0
        %1050 = vmatprep.subr.bf16.mxu0 0
        %1051 = vmatpush1.bf16.msra.mxu0 0
        %1052 = vmatprep.mubr.bf16.mxu0 0
        %1053 = vmatmul.mubr.bf16.gmra.mrb[0].mxu0 %v498
        %v1054 = vpop.f32.mrb[0].mxu0
        %v1055 = vadd.f32 %v468, %v1054
        %v1056 = vpop.f32.mrb[0].mxu0
        %v1057 = vpop.f32.mrb[0].mxu0
        %v1058 = vpop.f32.mrb[0].mxu0
        %1059 = vdwg.mxu0
        %v1064 = vunpack.c.l.b16 %v397
        %v1065 = vunpack.c.l.b16 %v398
        %v1066 = vunpack.c.l.b16 %v399
        %v1067 = vunpack.c.l.b16 %v400
        %v1068 = vpack.c.b16 %v1065, %v1064
        %v1069 = vpack.c.b16 %v1067, %v1066
        %1072 = vmatprep.subr.bf16.mxu0 0
        %1073 = vmatpush1.bf16.msra.mxu0 %v1068
        %1074 = vmatprep.subr.bf16.mxu0 0
        %1075 = vmatpush1.bf16.msra.mxu0 %v1069
        %1076 = vmatprep.subr.bf16.mxu0 0
        %1077 = vmatpush1.bf16.msra.mxu0 0
        %1078 = vmatprep.subr.bf16.mxu0 0
        %1079 = vmatpush1.bf16.msra.mxu0 0
        %1080 = vmatprep.subr.bf16.mxu0 0
        %1081 = vmatpush1.bf16.msra.mxu0 0
        %1082 = vmatprep.subr.bf16.mxu0 0
        %1083 = vmatpush1.bf16.msra.mxu0 0
        %1084 = vmatprep.subr.bf16.mxu0 0
        %1085 = vmatpush1.bf16.msra.mxu0 0
        %1086 = vmatprep.subr.bf16.mxu0 0
        %1087 = vmatpush1.bf16.msra.mxu0 0
        %1088 = vmatprep.subr.bf16.mxu0 0
        %1089 = vmatpush1.bf16.msra.mxu0 0
        %1090 = vmatprep.subr.bf16.mxu0 0
        %1091 = vmatpush1.bf16.msra.mxu0 0
        %1092 = vmatprep.subr.bf16.mxu0 0
        %1093 = vmatpush1.bf16.msra.mxu0 0
        %1094 = vmatprep.subr.bf16.mxu0 0
        %1095 = vmatpush1.bf16.msra.mxu0 0
        %1096 = vmatprep.subr.bf16.mxu0 0
        %1097 = vmatpush1.bf16.msra.mxu0 0
        %1098 = vmatprep.subr.bf16.mxu0 0
        %1099 = vmatpush1.bf16.msra.mxu0 0
        %1100 = vmatprep.subr.bf16.mxu0 0
        %1101 = vmatpush1.bf16.msra.mxu0 0
        %1102 = vmatprep.subr.bf16.mxu0 0
        %1103 = vmatpush1.bf16.msra.mxu0 0
        %1104 = vmatprep.mubr.bf16.mxu0 0
        %1105 = vmatmul.mubr.bf16.gmra.mrb[0].mxu0 %v498
        %v1106 = vpop.f32.mrb[0].mxu0
        %v1107 = vadd.f32 %v472, %v1106
        %v1108 = vpop.f32.mrb[0].mxu0
        %v1109 = vpop.f32.mrb[0].mxu0
        %v1110 = vpop.f32.mrb[0].mxu0
        %1111 = vdwg.mxu0
        %v1112 = vpack.c.bf16 %v535, %v535
        %v1113 = vpack.c.bf16 %v587, %v587
        %v1114 = vpack.c.bf16 %v639, %v639
        %v1115 = vpack.c.bf16 %v691, %v691
        %v1116 = vpack.c.bf16 %v743, %v743
        %v1117 = vpack.c.bf16 %v795, %v795
        %v1118 = vpack.c.bf16 %v847, %v847
        %v1119 = vpack.c.bf16 %v899, %v899
        %v1120 = vpack.c.bf16 %v951, %v951
        %v1121 = vpack.c.bf16 %v1003, %v1003
        %v1122 = vpack.c.bf16 %v1055, %v1055
        %v1123 = vpack.c.bf16 %v1107, %v1107
        %v1125 = vlaneseq
        %v1126 = vshrl.u32 %v1125, 7
        %v1127 = vsub.s32 0, %v1126
        %v1128 = vrot.slane %v326, %v1127
        %vm1130 = vcmask 64512
        %v1132 = vsel %vm1130, %v1112, 0
        %v1135 = vsel %vm1130, %v1116, 0
        %1137 = vmatprep.subr.bf16.mxu0 0
        %1138 = vmatpush1.bf16.xpose.msra.mxu0 %v1135
        %1139 = vmatprep.subr.bf16.mxu0 0
        %1140 = vmatpush1.bf16.xpose.msra.mxu0 0
        %1141 = vmatprep.subr.bf16.mxu0 0
        %1142 = vmatpush1.bf16.xpose.msra.mxu0 0
        %1143 = vmatprep.subr.bf16.mxu0 0
        %1144 = vmatpush1.bf16.xpose.msra.mxu0 0
        %1145 = vmatprep.subr.bf16.mxu0 0
        %1146 = vmatpush1.bf16.xpose.msra.mxu0 0
        %1147 = vmatprep.subr.bf16.mxu0 0
        %1148 = vmatpush1.bf16.xpose.msra.mxu0 0
        %1149 = vmatprep.subr.bf16.mxu0 0
        %1150 = vmatpush1.bf16.xpose.msra.mxu0 0
        %1151 = vmatprep.subr.bf16.mxu0 0
        %1152 = vmatpush1.bf16.xpose.msra.mxu0 0
        %1153 = vmatprep.subr.bf16.mxu0 0
        %1154 = vmatpush1.bf16.xpose.msra.mxu0 0
        %1155 = vmatprep.subr.bf16.mxu0 0
        %1156 = vmatpush1.bf16.xpose.msra.mxu0 0
        %1157 = vmatprep.subr.bf16.mxu0 0
        %1158 = vmatpush1.bf16.xpose.msra.mxu0 0
        %1159 = vmatprep.subr.bf16.mxu0 0
        %1160 = vmatpush1.bf16.xpose.msra.mxu0 0
        %1161 = vmatprep.subr.bf16.mxu0 0
        %1162 = vmatpush1.bf16.xpose.msra.mxu0 0
        %1163 = vmatprep.subr.bf16.mxu0 0
        %1164 = vmatpush1.bf16.xpose.msra.mxu0 0
        %1165 = vmatprep.subr.bf16.mxu0 0
        %1166 = vmatpush1.bf16.xpose.msra.mxu0 0
        %1167 = vmatprep.subr.bf16.mxu0 0
        %1168 = vmatpush1.bf16.xpose.msra.mxu0 0
        %1169 = vmatprep.mubr.bf16.mxu0 0
        %1170 = vmatmul.mubr.bf16.gmra.mrb[0].mxu0 %v1132
        %v1171 = vpop.f32.mrb[0].mxu0
        %v1172 = vadd.f32 %v1128, %v1171
        %v1173 = vpop.f32.mrb[0].mxu0
        %v1174 = vpop.f32.mrb[0].mxu0
        %v1175 = vpop.f32.mrb[0].mxu0
        %1176 = vdwg.mxu0
        %v1178 = vsel %vm1130, %v1113, 0
        %v1181 = vsel %vm1130, %v1117, 0
        %1183 = vmatprep.subr.bf16.mxu0 0
        %1184 = vmatpush1.bf16.xpose.msra.mxu0 %v1181
        %1185 = vmatprep.subr.bf16.mxu0 0
        %1186 = vmatpush1.bf16.xpose.msra.mxu0 0
        %1187 = vmatprep.subr.bf16.mxu0 0
        %1188 = vmatpush1.bf16.xpose.msra.mxu0 0
        %1189 = vmatprep.subr.bf16.mxu0 0
        %1190 = vmatpush1.bf16.xpose.msra.mxu0 0
        %1191 = vmatprep.subr.bf16.mxu0 0
        %1192 = vmatpush1.bf16.xpose.msra.mxu0 0
        %1193 = vmatprep.subr.bf16.mxu0 0
        %1194 = vmatpush1.bf16.xpose.msra.mxu0 0
        %1195 = vmatprep.subr.bf16.mxu0 0
        %1196 = vmatpush1.bf16.xpose.msra.mxu0 0
        %1197 = vmatprep.subr.bf16.mxu0 0
        %1198 = vmatpush1.bf16.xpose.msra.mxu0 0
        %1199 = vmatprep.subr.bf16.mxu0 0
        %1200 = vmatpush1.bf16.xpose.msra.mxu0 0
        %1201 = vmatprep.subr.bf16.mxu0 0
        %1202 = vmatpush1.bf16.xpose.msra.mxu0 0
        %1203 = vmatprep.subr.bf16.mxu0 0
        %1204 = vmatpush1.bf16.xpose.msra.mxu0 0
        %1205 = vmatprep.subr.bf16.mxu0 0
        %1206 = vmatpush1.bf16.xpose.msra.mxu0 0
        %1207 = vmatprep.subr.bf16.mxu0 0
        %1208 = vmatpush1.bf16.xpose.msra.mxu0 0
        %1209 = vmatprep.subr.bf16.mxu0 0
        %1210 = vmatpush1.bf16.xpose.msra.mxu0 0
        %1211 = vmatprep.subr.bf16.mxu0 0
        %1212 = vmatpush1.bf16.xpose.msra.mxu0 0
        %1213 = vmatprep.subr.bf16.mxu0 0
        %1214 = vmatpush1.bf16.xpose.msra.mxu0 0
        %1215 = vmatprep.mubr.bf16.mxu0 0
        %1216 = vmatmul.mubr.bf16.gmra.mrb[0].mxu0 %v1178
        %v1217 = vpop.f32.mrb[0].mxu0
        %v1218 = vadd.f32 %v1128, %v1217
        %v1219 = vpop.f32.mrb[0].mxu0
        %v1220 = vpop.f32.mrb[0].mxu0
        %v1221 = vpop.f32.mrb[0].mxu0
        %1222 = vdwg.mxu0
        %v1224 = vsel %vm1130, %v1114, 0
        %v1227 = vsel %vm1130, %v1118, 0
        %1229 = vmatprep.subr.bf16.mxu0 0
        %1230 = vmatpush1.bf16.xpose.msra.mxu0 %v1227
        %1231 = vmatprep.subr.bf16.mxu0 0
        %1232 = vmatpush1.bf16.xpose.msra.mxu0 0
        %1233 = vmatprep.subr.bf16.mxu0 0
        %1234 = vmatpush1.bf16.xpose.msra.mxu0 0
        %1235 = vmatprep.subr.bf16.mxu0 0
        %1236 = vmatpush1.bf16.xpose.msra.mxu0 0
        %1237 = vmatprep.subr.bf16.mxu0 0
        %1238 = vmatpush1.bf16.xpose.msra.mxu0 0
        %1239 = vmatprep.subr.bf16.mxu0 0
        %1240 = vmatpush1.bf16.xpose.msra.mxu0 0
        %1241 = vmatprep.subr.bf16.mxu0 0
        %1242 = vmatpush1.bf16.xpose.msra.mxu0 0
        %1243 = vmatprep.subr.bf16.mxu0 0
        %1244 = vmatpush1.bf16.xpose.msra.mxu0 0
        %1245 = vmatprep.subr.bf16.mxu0 0
        %1246 = vmatpush1.bf16.xpose.msra.mxu0 0
        %1247 = vmatprep.subr.bf16.mxu0 0
        %1248 = vmatpush1.bf16.xpose.msra.mxu0 0
        %1249 = vmatprep.subr.bf16.mxu0 0
        %1250 = vmatpush1.bf16.xpose.msra.mxu0 0
        %1251 = vmatprep.subr.bf16.mxu0 0
        %1252 = vmatpush1.bf16.xpose.msra.mxu0 0
        %1253 = vmatprep.subr.bf16.mxu0 0
        %1254 = vmatpush1.bf16.xpose.msra.mxu0 0
        %1255 = vmatprep.subr.bf16.mxu0 0
        %1256 = vmatpush1.bf16.xpose.msra.mxu0 0
        %1257 = vmatprep.subr.bf16.mxu0 0
        %1258 = vmatpush1.bf16.xpose.msra.mxu0 0
        %1259 = vmatprep.subr.bf16.mxu0 0
        %1260 = vmatpush1.bf16.xpose.msra.mxu0 0
        %1261 = vmatprep.mubr.bf16.mxu0 0
        %1262 = vmatmul.mubr.bf16.gmra.mrb[0].mxu0 %v1224
        %v1263 = vpop.f32.mrb[0].mxu0
        %v1264 = vadd.f32 %v1128, %v1263
        %v1265 = vpop.f32.mrb[0].mxu0
        %v1266 = vpop.f32.mrb[0].mxu0
        %v1267 = vpop.f32.mrb[0].mxu0
        %1268 = vdwg.mxu0
        %v1270 = vsel %vm1130, %v1115, 0
        %v1273 = vsel %vm1130, %v1119, 0
        %1275 = vmatprep.subr.bf16.mxu0 0
        %1276 = vmatpush1.bf16.xpose.msra.mxu0 %v1273
        %1277 = vmatprep.subr.bf16.mxu0 0
        %1278 = vmatpush1.bf16.xpose.msra.mxu0 0
        %1279 = vmatprep.subr.bf16.mxu0 0
        %1280 = vmatpush1.bf16.xpose.msra.mxu0 0
        %1281 = vmatprep.subr.bf16.mxu0 0
        %1282 = vmatpush1.bf16.xpose.msra.mxu0 0
        %1283 = vmatprep.subr.bf16.mxu0 0
        %1284 = vmatpush1.bf16.xpose.msra.mxu0 0
        %1285 = vmatprep.subr.bf16.mxu0 0
        %1286 = vmatpush1.bf16.xpose.msra.mxu0 0
        %1287 = vmatprep.subr.bf16.mxu0 0
        %1288 = vmatpush1.bf16.xpose.msra.mxu0 0
        %1289 = vmatprep.subr.bf16.mxu0 0
        %1290 = vmatpush1.bf16.xpose.msra.mxu0 0
        %1291 = vmatprep.subr.bf16.mxu0 0
        %1292 = vmatpush1.bf16.xpose.msra.mxu0 0
        %1293 = vmatprep.subr.bf16.mxu0 0
        %1294 = vmatpush1.bf16.xpose.msra.mxu0 0
        %1295 = vmatprep.subr.bf16.mxu0 0
        %1296 = vmatpush1.bf16.xpose.msra.mxu0 0
        %1297 = vmatprep.subr.bf16.mxu0 0
        %1298 = vmatpush1.bf16.xpose.msra.mxu0 0
        %1299 = vmatprep.subr.bf16.mxu0 0
        %1300 = vmatpush1.bf16.xpose.msra.mxu0 0
        %1301 = vmatprep.subr.bf16.mxu0 0
        %1302 = vmatpush1.bf16.xpose.msra.mxu0 0
        %1303 = vmatprep.subr.bf16.mxu0 0
        %1304 = vmatpush1.bf16.xpose.msra.mxu0 0
        %1305 = vmatprep.subr.bf16.mxu0 0
        %1306 = vmatpush1.bf16.xpose.msra.mxu0 0
        %1307 = vmatprep.mubr.bf16.mxu0 0
        %1308 = vmatmul.mubr.bf16.gmra.mrb[0].mxu0 %v1270
        %v1309 = vpop.f32.mrb[0].mxu0
        %v1310 = vadd.f32 %v1128, %v1309
        %v1311 = vpop.f32.mrb[0].mxu0
        %v1312 = vpop.f32.mrb[0].mxu0
        %v1313 = vpop.f32.mrb[0].mxu0
        %1314 = vdwg.mxu0
        %v1315 = vsel %vm1130, %v1172, -inf
        %1316 = vmax.xlane.f32.xlu0 %v1315
        %v1317 = vpop.xlane.xlu0 %1316
        %v1318 = vsel %vm1130, %v1218, -inf
        %1319 = vmax.xlane.f32.xlu0 %v1318
        %v1320 = vpop.xlane.xlu0 %1319
        %v1321 = vsel %vm1130, %v1264, -inf
        %1322 = vmax.xlane.f32.xlu0 %v1321
        %v1323 = vpop.xlane.xlu0 %1322
        %v1324 = vsel %vm1130, %v1310, -inf
        %1325 = vmax.xlane.f32.xlu0 %v1324
        %v1326 = vpop.xlane.xlu0 %1325
        %v1327 = vsub.f32 %v1172, %v1317
        %v1328 = vsub.f32 %v1218, %v1320
        %v1329 = vsub.f32 %v1264, %v1323
        %v1330 = vsub.f32 %v1310, %v1326
        %v1331 = vmul.f32 %v1327, 1.442695
        %v1332 = vpow.pop %v1331
        %v1333 = vmul.f32 %v1328, 1.442695
        %v1334 = vpow.pop %v1333
        %v1335 = vmul.f32 %v1329, 1.442695
        %v1336 = vpow.pop %v1335
        %v1337 = vmul.f32 %v1330, 1.442695
        %v1338 = vpow.pop %v1337
        %v1339 = vsel %vm1130, %v1332, 0.0
        %1340 = vadd.xlane.f32.xlu0 %v1339
        %v1341 = vpop.xlane.xlu0 %1340
        %v1342 = vsel %vm1130, %v1334, 0.0
        %1343 = vadd.xlane.f32.xlu0 %v1342
        %v1344 = vpop.xlane.xlu0 %1343
        %v1345 = vsel %vm1130, %v1336, 0.0
        %1346 = vadd.xlane.f32.xlu0 %v1345
        %v1347 = vpop.xlane.xlu0 %1346
        %v1348 = vsel %vm1130, %v1338, 0.0
        %1349 = vadd.xlane.f32.xlu0 %v1348
        %v1350 = vpop.xlane.xlu0 %1349
        %v1351 = vrcp.pop %v1341
        %v1352 = vrcp.pop %v1344
        %v1353 = vrcp.pop %v1347
        %v1354 = vrcp.pop %v1350
        %v1355 = vmul.f32 %v1332, %v1351
        %v1356 = vmul.f32 %v1334, %v1352
        %v1357 = vmul.f32 %v1336, %v1353
        %v1358 = vmul.f32 %v1338, %v1354
        %v1359 = vpack.c.bf16 %v1355, %v1355
        %v1360 = vpack.c.bf16 %v1356, %v1356
        %v1361 = vpack.c.bf16 %v1357, %v1357
        %v1362 = vpack.c.bf16 %v1358, %v1358
        %v1364 = vsel %vm1130, %v1359, 0
        %vm1366 = vcmask 1043456
        %v1368 = vsel %vm1366, %v1120, 0
        %1370 = vmatprep.subr.bf16.mxu0 0
        %1371 = vmatpush1.bf16.msra.mxu0 %v1368
        %1372 = vmatprep.subr.bf16.mxu0 0
        %1373 = vmatpush1.bf16.msra.mxu0 0
        %1374 = vmatprep.subr.bf16.mxu0 0
        %1375 = vmatpush1.bf16.msra.mxu0 0
        %1376 = vmatprep.subr.bf16.mxu0 0
        %1377 = vmatpush1.bf16.msra.mxu0 0
        %1378 = vmatprep.subr.bf16.mxu0 0
        %1379 = vmatpush1.bf16.msra.mxu0 0
        %1380 = vmatprep.subr.bf16.mxu0 0
        %1381 = vmatpush1.bf16.msra.mxu0 0
        %1382 = vmatprep.subr.bf16.mxu0 0
        %1383 = vmatpush1.bf16.msra.mxu0 0
        %1384 = vmatprep.subr.bf16.mxu0 0
        %1385 = vmatpush1.bf16.msra.mxu0 0
        %1386 = vmatprep.subr.bf16.mxu0 0
        %1387 = vmatpush1.bf16.msra.mxu0 0
        %1388 = vmatprep.subr.bf16.mxu0 0
        %1389 = vmatpush1.bf16.msra.mxu0 0
        %1390 = vmatprep.subr.bf16.mxu0 0
        %1391 = vmatpush1.bf16.msra.mxu0 0
        %1392 = vmatprep.subr.bf16.mxu0 0
        %1393 = vmatpush1.bf16.msra.mxu0 0
        %1394 = vmatprep.subr.bf16.mxu0 0
        %1395 = vmatpush1.bf16.msra.mxu0 0
        %1396 = vmatprep.subr.bf16.mxu0 0
        %1397 = vmatpush1.bf16.msra.mxu0 0
        %1398 = vmatprep.subr.bf16.mxu0 0
        %1399 = vmatpush1.bf16.msra.mxu0 0
        %1400 = vmatprep.subr.bf16.mxu0 0
        %1401 = vmatpush1.bf16.msra.mxu0 0
        %1402 = vmatprep.mubr.bf16.mxu0 0
        %1403 = vmatmul.mubr.bf16.gmra.mrb[0].mxu0 %v1364
        %v1404 = vpop.f32.mrb[0].mxu0
        %v1405 = vadd.f32 0.0, %v1404
        %v1406 = vpop.f32.mrb[0].mxu0
        %v1407 = vpop.f32.mrb[0].mxu0
        %v1408 = vpop.f32.mrb[0].mxu0
        %1409 = vdwg.mxu0
        %v1411 = vsel %vm1130, %v1360, 0
        %v1414 = vsel %vm1366, %v1121, 0
        %1416 = vmatprep.subr.bf16.mxu0 0
        %1417 = vmatpush1.bf16.msra.mxu0 %v1414
        %1418 = vmatprep.subr.bf16.mxu0 0
        %1419 = vmatpush1.bf16.msra.mxu0 0
        %1420 = vmatprep.subr.bf16.mxu0 0
        %1421 = vmatpush1.bf16.msra.mxu0 0
        %1422 = vmatprep.subr.bf16.mxu0 0
        %1423 = vmatpush1.bf16.msra.mxu0 0
        %1424 = vmatprep.subr.bf16.mxu0 0
        %1425 = vmatpush1.bf16.msra.mxu0 0
        %1426 = vmatprep.subr.bf16.mxu0 0
        %1427 = vmatpush1.bf16.msra.mxu0 0
        %1428 = vmatprep.subr.bf16.mxu0 0
        %1429 = vmatpush1.bf16.msra.mxu0 0
        %1430 = vmatprep.subr.bf16.mxu0 0
        %1431 = vmatpush1.bf16.msra.mxu0 0
        %1432 = vmatprep.subr.bf16.mxu0 0
        %1433 = vmatpush1.bf16.msra.mxu0 0
        %1434 = vmatprep.subr.bf16.mxu0 0
        %1435 = vmatpush1.bf16.msra.mxu0 0
        %1436 = vmatprep.subr.bf16.mxu0 0
        %1437 = vmatpush1.bf16.msra.mxu0 0
        %1438 = vmatprep.subr.bf16.mxu0 0
        %1439 = vmatpush1.bf16.msra.mxu0 0
        %1440 = vmatprep.subr.bf16.mxu0 0
        %1441 = vmatpush1.bf16.msra.mxu0 0
        %1442 = vmatprep.subr.bf16.mxu0 0
        %1443 = vmatpush1.bf16.msra.mxu0 0
        %1444 = vmatprep.subr.bf16.mxu0 0
        %1445 = vmatpush1.bf16.msra.mxu0 0
        %1446 = vmatprep.subr.bf16.mxu0 0
        %1447 = vmatpush1.bf16.msra.mxu0 0
        %1448 = vmatprep.mubr.bf16.mxu0 0
        %1449 = vmatmul.mubr.bf16.gmra.mrb[0].mxu0 %v1411
        %v1450 = vpop.f32.mrb[0].mxu0
        %v1451 = vadd.f32 0.0, %v1450
        %v1452 = vpop.f32.mrb[0].mxu0
        %v1453 = vpop.f32.mrb[0].mxu0
        %v1454 = vpop.f32.mrb[0].mxu0
        %1455 = vdwg.mxu0
        %v1457 = vsel %vm1130, %v1361, 0
        %v1460 = vsel %vm1366, %v1122, 0
        %1462 = vmatprep.subr.bf16.mxu0 0
        %1463 = vmatpush1.bf16.msra.mxu0 %v1460
        %1464 = vmatprep.subr.bf16.mxu0 0
        %1465 = vmatpush1.bf16.msra.mxu0 0
        %1466 = vmatprep.subr.bf16.mxu0 0
        %1467 = vmatpush1.bf16.msra.mxu0 0
        %1468 = vmatprep.subr.bf16.mxu0 0
        %1469 = vmatpush1.bf16.msra.mxu0 0
        %1470 = vmatprep.subr.bf16.mxu0 0
        %1471 = vmatpush1.bf16.msra.mxu0 0
        %1472 = vmatprep.subr.bf16.mxu0 0
        %1473 = vmatpush1.bf16.msra.mxu0 0
        %1474 = vmatprep.subr.bf16.mxu0 0
        %1475 = vmatpush1.bf16.msra.mxu0 0
        %1476 = vmatprep.subr.bf16.mxu0 0
        %1477 = vmatpush1.bf16.msra.mxu0 0
        %1478 = vmatprep.subr.bf16.mxu0 0
        %1479 = vmatpush1.bf16.msra.mxu0 0
        %1480 = vmatprep.subr.bf16.mxu0 0
        %1481 = vmatpush1.bf16.msra.mxu0 0
        %1482 = vmatprep.subr.bf16.mxu0 0
        %1483 = vmatpush1.bf16.msra.mxu0 0
        %1484 = vmatprep.subr.bf16.mxu0 0
        %1485 = vmatpush1.bf16.msra.mxu0 0
        %1486 = vmatprep.subr.bf16.mxu0 0
        %1487 = vmatpush1.bf16.msra.mxu0 0
        %1488 = vmatprep.subr.bf16.mxu0 0
        %1489 = vmatpush1.bf16.msra.mxu0 0
        %1490 = vmatprep.subr.bf16.mxu0 0
        %1491 = vmatpush1.bf16.msra.mxu0 0
        %1492 = vmatprep.subr.bf16.mxu0 0
        %1493 = vmatpush1.bf16.msra.mxu0 0
        %1494 = vmatprep.mubr.bf16.mxu0 0
        %1495 = vmatmul.mubr.bf16.gmra.mrb[0].mxu0 %v1457
        %v1496 = vpop.f32.mrb[0].mxu0
        %v1497 = vadd.f32 0.0, %v1496
        %v1498 = vpop.f32.mrb[0].mxu0
        %v1499 = vpop.f32.mrb[0].mxu0
        %v1500 = vpop.f32.mrb[0].mxu0
        %1501 = vdwg.mxu0
        %v1503 = vsel %vm1130, %v1362, 0
        %v1506 = vsel %vm1366, %v1123, 0
        %1508 = vmatprep.subr.bf16.mxu0 0
        %1509 = vmatpush1.bf16.msra.mxu0 %v1506
        %1510 = vmatprep.subr.bf16.mxu0 0
        %1511 = vmatpush1.bf16.msra.mxu0 0
        %1512 = vmatprep.subr.bf16.mxu0 0
        %1513 = vmatpush1.bf16.msra.mxu0 0
        %1514 = vmatprep.subr.bf16.mxu0 0
        %1515 = vmatpush1.bf16.msra.mxu0 0
        %1516 = vmatprep.subr.bf16.mxu0 0
        %1517 = vmatpush1.bf16.msra.mxu0 0
        %1518 = vmatprep.subr.bf16.mxu0 0
        %1519 = vmatpush1.bf16.msra.mxu0 0
        %1520 = vmatprep.subr.bf16.mxu0 0
        %1521 = vmatpush1.bf16.msra.mxu0 0
        %1522 = vmatprep.subr.bf16.mxu0 0
        %1523 = vmatpush1.bf16.msra.mxu0 0
        %1524 = vmatprep.subr.bf16.mxu0 0
        %1525 = vmatpush1.bf16.msra.mxu0 0
        %1526 = vmatprep.subr.bf16.mxu0 0
        %1527 = vmatpush1.bf16.msra.mxu0 0
        %1528 = vmatprep.subr.bf16.mxu0 0
        %1529 = vmatpush1.bf16.msra.mxu0 0
        %1530 = vmatprep.subr.bf16.mxu0 0
        %1531 = vmatpush1.bf16.msra.mxu0 0
        %1532 = vmatprep.subr.bf16.mxu0 0
        %1533 = vmatpush1.bf16.msra.mxu0 0
        %1534 = vmatprep.subr.bf16.mxu0 0
        %1535 = vmatpush1.bf16.msra.mxu0 0
        %1536 = vmatprep.subr.bf16.mxu0 0
        %1537 = vmatpush1.bf16.msra.mxu0 0
        %1538 = vmatprep.subr.bf16.mxu0 0
        %1539 = vmatpush1.bf16.msra.mxu0 0
        %1540 = vmatprep.mubr.bf16.mxu0 0
        %1541 = vmatmul.mubr.bf16.gmra.mrb[0].mxu0 %v1503
        %v1542 = vpop.f32.mrb[0].mxu0
        %v1543 = vadd.f32 0.0, %v1542
        %v1544 = vpop.f32.mrb[0].mxu0
        %v1545 = vpop.f32.mrb[0].mxu0
        %v1546 = vpop.f32.mrb[0].mxu0
        %1547 = vdwg.mxu0
        %v1548 = vpack.c.bf16 %v1405, %v1405
        %v1549 = vpack.c.bf16 %v1451, %v1451
        %v1550 = vpack.c.bf16 %v1497, %v1497
        %v1551 = vpack.c.bf16 %v1543, %v1543
        %v1552 = vld [vmem:[%s5] sm:$0xf]
        %v1553 = vld [vmem:[%s5 + $0x4] sm:$0xf]
        %v1554 = vld [vmem:[%s5 + $0x8] sm:$0xf]
        %v1555 = vld [vmem:[%s5 + $0xc] sm:$0xf]
        %v1557 = vsel %vm1130, %v1548, 0
        %v1560 = vsel %vm1366, %v1552, 0
        %1562 = vmatprep.subr.bf16.mxu0 0
        %1563 = vmatpush1.bf16.msra.mxu0 %v1560
        %1564 = vmatprep.subr.bf16.mxu0 0
        %1565 = vmatpush1.bf16.msra.mxu0 0
        %1566 = vmatprep.subr.bf16.mxu0 0
        %1567 = vmatpush1.bf16.msra.mxu0 0
        %1568 = vmatprep.subr.bf16.mxu0 0
        %1569 = vmatpush1.bf16.msra.mxu0 0
        %1570 = vmatprep.subr.bf16.mxu0 0
        %1571 = vmatpush1.bf16.msra.mxu0 0
        %1572 = vmatprep.subr.bf16.mxu0 0
        %1573 = vmatpush1.bf16.msra.mxu0 0
        %1574 = vmatprep.subr.bf16.mxu0 0
        %1575 = vmatpush1.bf16.msra.mxu0 0
        %1576 = vmatprep.subr.bf16.mxu0 0
        %1577 = vmatpush1.bf16.msra.mxu0 0
        %1578 = vmatprep.subr.bf16.mxu0 0
        %1579 = vmatpush1.bf16.msra.mxu0 0
        %1580 = vmatprep.subr.bf16.mxu0 0
        %1581 = vmatpush1.bf16.msra.mxu0 0
        %1582 = vmatprep.subr.bf16.mxu0 0
        %1583 = vmatpush1.bf16.msra.mxu0 0
        %1584 = vmatprep.subr.bf16.mxu0 0
        %1585 = vmatpush1.bf16.msra.mxu0 0
        %1586 = vmatprep.subr.bf16.mxu0 0
        %1587 = vmatpush1.bf16.msra.mxu0 0
        %1588 = vmatprep.subr.bf16.mxu0 0
        %1589 = vmatpush1.bf16.msra.mxu0 0
        %1590 = vmatprep.subr.bf16.mxu0 0
        %1591 = vmatpush1.bf16.msra.mxu0 0
        %1592 = vmatprep.subr.bf16.mxu0 0
        %1593 = vmatpush1.bf16.msra.mxu0 0
        %1594 = vmatprep.mubr.bf16.mxu0 0
        %1595 = vmatmul.mubr.bf16.gmra.mrb[0].mxu0 %v1557
        %v1596 = vpop.f32.mrb[0].mxu0
        %v1597 = vadd.f32 0.0, %v1596
        %v1598 = vpop.f32.mrb[0].mxu0
        %v1599 = vpop.f32.mrb[0].mxu0
        %v1600 = vpop.f32.mrb[0].mxu0
        %1601 = vdwg.mxu0
        %v1603 = vsel %vm1130, %v1549, 0
        %v1606 = vsel %vm1366, %v1553, 0
        %1608 = vmatprep.subr.bf16.mxu0 0
        %1609 = vmatpush1.bf16.msra.mxu0 %v1606
        %1610 = vmatprep.subr.bf16.mxu0 0
        %1611 = vmatpush1.bf16.msra.mxu0 0
        %1612 = vmatprep.subr.bf16.mxu0 0
        %1613 = vmatpush1.bf16.msra.mxu0 0
        %1614 = vmatprep.subr.bf16.mxu0 0
        %1615 = vmatpush1.bf16.msra.mxu0 0
        %1616 = vmatprep.subr.bf16.mxu0 0
        %1617 = vmatpush1.bf16.msra.mxu0 0
        %1618 = vmatprep.subr.bf16.mxu0 0
        %1619 = vmatpush1.bf16.msra.mxu0 0
        %1620 = vmatprep.subr.bf16.mxu0 0
        %1621 = vmatpush1.bf16.msra.mxu0 0
        %1622 = vmatprep.subr.bf16.mxu0 0
        %1623 = vmatpush1.bf16.msra.mxu0 0
        %1624 = vmatprep.subr.bf16.mxu0 0
        %1625 = vmatpush1.bf16.msra.mxu0 0
        %1626 = vmatprep.subr.bf16.mxu0 0
        %1627 = vmatpush1.bf16.msra.mxu0 0
        %1628 = vmatprep.subr.bf16.mxu0 0
        %1629 = vmatpush1.bf16.msra.mxu0 0
        %1630 = vmatprep.subr.bf16.mxu0 0
        %1631 = vmatpush1.bf16.msra.mxu0 0
        %1632 = vmatprep.subr.bf16.mxu0 0
        %1633 = vmatpush1.bf16.msra.mxu0 0
        %1634 = vmatprep.subr.bf16.mxu0 0
        %1635 = vmatpush1.bf16.msra.mxu0 0
        %1636 = vmatprep.subr.bf16.mxu0 0
        %1637 = vmatpush1.bf16.msra.mxu0 0
        %1638 = vmatprep.subr.bf16.mxu0 0
        %1639 = vmatpush1.bf16.msra.mxu0 0
        %1640 = vmatprep.mubr.bf16.mxu0 0
        %1641 = vmatmul.mubr.bf16.gmra.mrb[0].mxu0 %v1603
        %v1642 = vpop.f32.mrb[0].mxu0
        %v1643 = vadd.f32 0.0, %v1642
        %v1644 = vpop.f32.mrb[0].mxu0
        %v1645 = vpop.f32.mrb[0].mxu0
        %v1646 = vpop.f32.mrb[0].mxu0
        %1647 = vdwg.mxu0
        %v1649 = vsel %vm1130, %v1550, 0
        %v1652 = vsel %vm1366, %v1554, 0
        %1654 = vmatprep.subr.bf16.mxu0 0
        %1655 = vmatpush1.bf16.msra.mxu0 %v1652
        %1656 = vmatprep.subr.bf16.mxu0 0
        %1657 = vmatpush1.bf16.msra.mxu0 0
        %1658 = vmatprep.subr.bf16.mxu0 0
        %1659 = vmatpush1.bf16.msra.mxu0 0
        %1660 = vmatprep.subr.bf16.mxu0 0
        %1661 = vmatpush1.bf16.msra.mxu0 0
        %1662 = vmatprep.subr.bf16.mxu0 0
        %1663 = vmatpush1.bf16.msra.mxu0 0
        %1664 = vmatprep.subr.bf16.mxu0 0
        %1665 = vmatpush1.bf16.msra.mxu0 0
        %1666 = vmatprep.subr.bf16.mxu0 0
        %1667 = vmatpush1.bf16.msra.mxu0 0
        %1668 = vmatprep.subr.bf16.mxu0 0
        %1669 = vmatpush1.bf16.msra.mxu0 0
        %1670 = vmatprep.subr.bf16.mxu0 0
        %1671 = vmatpush1.bf16.msra.mxu0 0
        %1672 = vmatprep.subr.bf16.mxu0 0
        %1673 = vmatpush1.bf16.msra.mxu0 0
        %1674 = vmatprep.subr.bf16.mxu0 0
        %1675 = vmatpush1.bf16.msra.mxu0 0
        %1676 = vmatprep.subr.bf16.mxu0 0
        %1677 = vmatpush1.bf16.msra.mxu0 0
        %1678 = vmatprep.subr.bf16.mxu0 0
        %1679 = vmatpush1.bf16.msra.mxu0 0
        %1680 = vmatprep.subr.bf16.mxu0 0
        %1681 = vmatpush1.bf16.msra.mxu0 0
        %1682 = vmatprep.subr.bf16.mxu0 0
        %1683 = vmatpush1.bf16.msra.mxu0 0
        %1684 = vmatprep.subr.bf16.mxu0 0
        %1685 = vmatpush1.bf16.msra.mxu0 0
        %1686 = vmatprep.mubr.bf16.mxu0 0
        %1687 = vmatmul.mubr.bf16.gmra.mrb[0].mxu0 %v1649
        %v1688 = vpop.f32.mrb[0].mxu0
        %v1689 = vadd.f32 0.0, %v1688
        %v1690 = vpop.f32.mrb[0].mxu0
        %v1691 = vpop.f32.mrb[0].mxu0
        %v1692 = vpop.f32.mrb[0].mxu0
        %1693 = vdwg.mxu0
        %v1695 = vsel %vm1130, %v1551, 0
        %v1698 = vsel %vm1366, %v1555, 0
        %1700 = vmatprep.subr.bf16.mxu0 0
        %1701 = vmatpush1.bf16.msra.mxu0 %v1698
        %1702 = vmatprep.subr.bf16.mxu0 0
        %1703 = vmatpush1.bf16.msra.mxu0 0
        %1704 = vmatprep.subr.bf16.mxu0 0
        %1705 = vmatpush1.bf16.msra.mxu0 0
        %1706 = vmatprep.subr.bf16.mxu0 0
        %1707 = vmatpush1.bf16.msra.mxu0 0
        %1708 = vmatprep.subr.bf16.mxu0 0
        %1709 = vmatpush1.bf16.msra.mxu0 0
        %1710 = vmatprep.subr.bf16.mxu0 0
        %1711 = vmatpush1.bf16.msra.mxu0 0
        %1712 = vmatprep.subr.bf16.mxu0 0
        %1713 = vmatpush1.bf16.msra.mxu0 0
        %1714 = vmatprep.subr.bf16.mxu0 0
        %1715 = vmatpush1.bf16.msra.mxu0 0
        %1716 = vmatprep.subr.bf16.mxu0 0
        %1717 = vmatpush1.bf16.msra.mxu0 0
        %1718 = vmatprep.subr.bf16.mxu0 0
        %1719 = vmatpush1.bf16.msra.mxu0 0
        %1720 = vmatprep.subr.bf16.mxu0 0
        %1721 = vmatpush1.bf16.msra.mxu0 0
        %1722 = vmatprep.subr.bf16.mxu0 0
        %1723 = vmatpush1.bf16.msra.mxu0 0
        %1724 = vmatprep.subr.bf16.mxu0 0
        %1725 = vmatpush1.bf16.msra.mxu0 0
        %1726 = vmatprep.subr.bf16.mxu0 0
        %1727 = vmatpush1.bf16.msra.mxu0 0
        %1728 = vmatprep.subr.bf16.mxu0 0
        %1729 = vmatpush1.bf16.msra.mxu0 0
        %1730 = vmatprep.subr.bf16.mxu0 0
        %1731 = vmatpush1.bf16.msra.mxu0 0
        %1732 = vmatprep.mubr.bf16.mxu0 0
        %1733 = vmatmul.mubr.bf16.gmra.mrb[0].mxu0 %v1695
        %v1734 = vpop.f32.mrb[0].mxu0
        %v1735 = vadd.f32 0.0, %v1734
        %v1736 = vpop.f32.mrb[0].mxu0
        %v1737 = vpop.f32.mrb[0].mxu0
        %v1738 = vpop.f32.mrb[0].mxu0
        %1739 = vdwg.mxu0
        %v1740 = vsel %vm327, %v1597, 0.0
        %v1741 = vsel %vm327, %v1643, 0.0
        %v1742 = vadd.f32 %v1740, %v1741
        %v1743 = vsel %vm327, %v1689, 0.0
        %v1744 = vadd.f32 %v1742, %v1743
        %v1745 = vsel %vm327, %v1735, 0.0
        %v1746 = vadd.f32 %v1744, %v1745
        %v1747 = vlaneseq
        %v1748 = vshrl.u32 %v1747, 7
        %v1749 = vsub.s32 0, %v1748
        %v1750 = vrot.slane %v321, %v1749
        %v1751 = vadd.f32 %v1746, %v1750
        %v1752 = vadd.f32 %v316, %v1751
        %v1753 = vsel %vm327, %v1752, 0.0
        %1754 = vadd.xlane.f32.xlu0 %v1753
        %v1755 = vpop.xlane.xlu0 %1754
        %v1756 = vmul.f32 %v1755, %v331
        %v1757 = vsub.f32 %v1752, %v1756
        %v1758 = vmul.f32 %v1757, %v1757
        %v1759 = vsel %vm327, %v1758, 0.0
        %1760 = vadd.xlane.f32.xlu0 %v1759
        %v1761 = vpop.xlane.xlu0 %1760
        %v1762 = vmul.f32 %v1761, %v331
        %v1763 = vadd.f32 %v1762, 1e-05
        %v1764 = vrsqrt.pop %v1763
        %v1765 = vmul.f32 %v1757, %v1764
        %v1766 = vlaneseq
        %v1767 = vshrl.u32 %v1766, 7
        %v1768 = vsub.s32 0, %v1767
        %v1769 = vrot.slane %v319, %v1768
        %v1770 = vmul.f32 %v1765, %v1769
        %v1771 = vlaneseq
        %v1772 = vshrl.u32 %v1771, 7
        %v1773 = vsub.s32 0, %v1772
        %v1774 = vrot.slane %v320, %v1773
        %v1775 = vadd.f32 %v1770, %v1774
        %v1776 = vpack.c.bf16 %v1775, %v1775
        %v1777 = vld [vmem:[%s6] sm:$0xf]
        %v1778 = vld [vmem:[%s6 + $0x4] sm:$0xf]
        %v1779 = vld [vmem:[%s6 + $0x8] sm:$0xf]
        %v1780 = vld [vmem:[%s6 + $0xc] sm:$0xf]
        %v1781 = vlaneseq
        %v1782 = vshrl.u32 %v1781, 7
        %v1783 = vsub.s32 0, %v1782
        %v1784 = vrot.slane %v323, %v1783
        %v1789 = vunpack.c.l.b16 %v1777
        %v1790 = vunpack.c.l.b16 %v1778
        %v1791 = vunpack.c.l.b16 %v1779
        %v1792 = vunpack.c.l.b16 %v1780
        %v1793 = vpack.c.b16 %v1790, %v1789
        %v1794 = vpack.c.b16 %v1792, %v1791
        %v1798 = vsel %vm327, %v1776, 0
        %1800 = vmatprep.subr.bf16.mxu0 0
        %1801 = vmatpush1.bf16.msra.mxu0 %v1793
        %1802 = vmatprep.subr.bf16.mxu0 0
        %1803 = vmatpush1.bf16.msra.mxu0 %v1794
        %1804 = vmatprep.subr.bf16.mxu0 0
        %1805 = vmatpush1.bf16.msra.mxu0 0
        %1806 = vmatprep.subr.bf16.mxu0 0
        %1807 = vmatpush1.bf16.msra.mxu0 0
        %1808 = vmatprep.subr.bf16.mxu0 0
        %1809 = vmatpush1.bf16.msra.mxu0 0
        %1810 = vmatprep.subr.bf16.mxu0 0
        %1811 = vmatpush1.bf16.msra.mxu0 0
        %1812 = vmatprep.subr.bf16.mxu0 0
        %1813 = vmatpush1.bf16.msra.mxu0 0
        %1814 = vmatprep.subr.bf16.mxu0 0
        %1815 = vmatpush1.bf16.msra.mxu0 0
        %1816 = vmatprep.subr.bf16.mxu0 0
        %1817 = vmatpush1.bf16.msra.mxu0 0
        %1818 = vmatprep.subr.bf16.mxu0 0
        %1819 = vmatpush1.bf16.msra.mxu0 0
        %1820 = vmatprep.subr.bf16.mxu0 0
        %1821 = vmatpush1.bf16.msra.mxu0 0
        %1822 = vmatprep.subr.bf16.mxu0 0
        %1823 = vmatpush1.bf16.msra.mxu0 0
        %1824 = vmatprep.subr.bf16.mxu0 0
        %1825 = vmatpush1.bf16.msra.mxu0 0
        %1826 = vmatprep.subr.bf16.mxu0 0
        %1827 = vmatpush1.bf16.msra.mxu0 0
        %1828 = vmatprep.subr.bf16.mxu0 0
        %1829 = vmatpush1.bf16.msra.mxu0 0
        %1830 = vmatprep.subr.bf16.mxu0 0
        %1831 = vmatpush1.bf16.msra.mxu0 0
        %1832 = vmatprep.mubr.bf16.mxu0 0
        %1833 = vmatmul.mubr.bf16.gmra.mrb[0].mxu0 %v1798
        %v1834 = vpop.f32.mrb[0].mxu0
        %v1835 = vadd.f32 %v1784, %v1834
        %v1836 = vpop.f32.mrb[0].mxu0
        %v1837 = vpop.f32.mrb[0].mxu0
        %v1838 = vpop.f32.mrb[0].mxu0
        %1839 = vdwg.mxu0
        %v1840 = vmax.f32 %v1835, 0.0
        %v1841 = vpack.c.bf16 %v1840, %v1840
        %v1842 = vld [vmem:[%s7] sm:$0xf]
        %v1843 = vld [vmem:[%s7 + $0x4] sm:$0xf]
        %v1844 = vld [vmem:[%s7 + $0x8] sm:$0xf]
        %v1845 = vld [vmem:[%s7 + $0xc] sm:$0xf]
        %v1846 = vld [vmem:[%s7 + $0x10] sm:$0xf]
        %v1847 = vld [vmem:[%s7 + $0x14] sm:$0xf]
        %v1848 = vld [vmem:[%s7 + $0x18] sm:$0xf]
        %v1849 = vld [vmem:[%s7 + $0x1c] sm:$0xf]
        %v1850 = vlaneseq
        %v1851 = vshrl.u32 %v1850, 7
        %v1852 = vsub.s32 0, %v1851
        %v1853 = vrot.slane %v322, %v1852
        %v1862 = vunpack.c.l.b16 %v1842
        %v1863 = vunpack.c.l.b16 %v1843
        %v1864 = vunpack.c.l.b16 %v1844
        %v1865 = vunpack.c.l.b16 %v1845
        %v1866 = vunpack.c.l.b16 %v1846
        %v1867 = vunpack.c.l.b16 %v1847
        %v1868 = vunpack.c.l.b16 %v1848
        %v1869 = vunpack.c.l.b16 %v1849
        %v1870 = vpack.c.b16 %v1863, %v1862
        %v1871 = vpack.c.b16 %v1865, %v1864
        %v1872 = vpack.c.b16 %v1867, %v1866
        %v1873 = vpack.c.b16 %v1869, %v1868
        %vm1878 = vcmask 523264
        %v1880 = vsel %vm1878, %v1841, 0
        %1882 = vmatprep.subr.bf16.mxu0 0
        %1883 = vmatpush1.bf16.msra.mxu0 %v1870
        %1884 = vmatprep.subr.bf16.mxu0 0
        %1885 = vmatpush1.bf16.msra.mxu0 %v1871
        %1886 = vmatprep.subr.bf16.mxu0 0
        %1887 = vmatpush1.bf16.msra.mxu0 %v1872
        %1888 = vmatprep.subr.bf16.mxu0 0
        %1889 = vmatpush1.bf16.msra.mxu0 %v1873
        %1890 = vmatprep.subr.bf16.mxu0 0
        %1891 = vmatpush1.bf16.msra.mxu0 0
        %1892 = vmatprep.subr.bf16.mxu0 0
        %1893 = vmatpush1.bf16.msra.mxu0 0
        %1894 = vmatprep.subr.bf16.mxu0 0
        %1895 = vmatpush1.bf16.msra.mxu0 0
        %1896 = vmatprep.subr.bf16.mxu0 0
        %1897 = vmatpush1.bf16.msra.mxu0 0
        %1898 = vmatprep.subr.bf16.mxu0 0
        %1899 = vmatpush1.bf16.msra.mxu0 0
        %1900 = vmatprep.subr.bf16.mxu0 0
        %1901 = vmatpush1.bf16.msra.mxu0 0
        %1902 = vmatprep.subr.bf16.mxu0 0
        %1903 = vmatpush1.bf16.msra.mxu0 0
        %1904 = vmatprep.subr.bf16.mxu0 0
        %1905 = vmatpush1.bf16.msra.mxu0 0
        %1906 = vmatprep.subr.bf16.mxu0 0
        %1907 = vmatpush1.bf16.msra.mxu0 0
        %1908 = vmatprep.subr.bf16.mxu0 0
        %1909 = vmatpush1.bf16.msra.mxu0 0
        %1910 = vmatprep.subr.bf16.mxu0 0
        %1911 = vmatpush1.bf16.msra.mxu0 0
        %1912 = vmatprep.subr.bf16.mxu0 0
        %1913 = vmatpush1.bf16.msra.mxu0 0
        %1914 = vmatprep.mubr.bf16.mxu0 0
        %1915 = vmatmul.mubr.bf16.gmra.mrb[0].mxu0 %v1880
        %v1916 = vpop.f32.mrb[0].mxu0
        %v1917 = vadd.f32 %v1853, %v1916
        %v1918 = vpop.f32.mrb[0].mxu0
        %v1919 = vpop.f32.mrb[0].mxu0
        %v1920 = vpop.f32.mrb[0].mxu0
        %1921 = vdwg.mxu0
        %v1922 = vadd.f32 %v1752, %v1917
        %1923 = vst.msk [vmem:[%s307] sm:$0xff] %vm327, %v1922
        %s1924 = sand.u32 %s208, 1
        %s1925 = scalar_lea.sflag [#allocation3], %s1924
        %s1926 = sand.u32 %s208, 1
        %s1927 = smul.addr %s1926, 8
        %s1928 = scalar_lea.vmem [#allocation2], %s1927
        // Predicated region
        $region53: #{encoder_layer.1} parent=51 // pred_check
          %p1929 = pneg %p218
        $region54: #{encoder_layer.1} parent=51 // pred_check_branch
          %1931 = sbr.rel (%p1929) target = $region56
        $region55: #{encoder_layer.1} parent=51 // pred_region
          %s1933 = ssub.s32 128, 128
          %1934 = vsyncadd %s1925, %s1933
          %s1935 = smul.addr %s22, 128
          %s1936 = scalar_lea.hbm %s8, %s1935
          %s1938 = sshll.u32 %s1928, 4
          %s1939 = int_to_ptr.vmem [resolvable:$true] %s1938
          %1941 = dma.vmem_to_hbm [thread:$0]  %s1939, 128, %s1936, %s1925
        $region56: #{encoder_layer.1} parent=51 // pred_fallthru
          _
      $region52: #{encoder_layer.1} parent=5 // pred_fallthru
        _
      %p1942 = scmp.le.s32.totalorder 2, %s17
      // Predicated region
      $region57: #{encoder_layer.1} parent=5 // pred_check
        %p1943 = pneg %p1942
      $region58: #{encoder_layer.1} parent=5 // pred_check_branch
        %1945 = sbr.rel (%p1943) target = $region60
      $region59: #{encoder_layer.1} parent=5 // pred_region
        %s1946 = ssub.s32 %s17, 2
        // Predicated region
        $region61: #{encoder_layer.1} parent=59 // pred_check
          %p1947 = pneg %p224
        $region62: #{encoder_layer.1} parent=59 // pred_check_branch
          %1949 = sbr.rel (%p1947) target = $region64
        $region63: #{encoder_layer.1} parent=59 // pred_region
          %s1950 = sand.u32 %s209, 1
          %s1951 = scalar_lea.sflag [#allocation3], %s1950
          %s1952 = sand.u32 %s209, 1
          %s1953 = smul.addr %s1952, 8
          %s1954 = scalar_lea.vmem [#allocation2], %s1953
          %1955 = dma.done %s1951, 128
        $region64: #{encoder_layer.1} parent=59 // pred_fallthru
          _
      $region60: #{encoder_layer.1} parent=5 // pred_fallthru
        _
    $region6: #{encoder_layer.1} parent=1 // loop_footer
      %s21 = sadd.s32 1, %s17
    $region7: #{encoder_layer.1} parent=1 // loop_footer_branch
      %16 = sbr.rel target = $region3
    $region8: #{encoder_layer.1} parent=1 // loop_exit
      _
    %1956 = vsyncpa [#allocation3], 1
    %s1957 = scalar_lea.sflag [#allocation3], 1
    %1958 = vsyncpa %s1957, 1

</llo_original>
